<compile_context>
chip_gen: v6e
topology: v6e:2x2x1
jax: 0.10.0
libtpu: 0.0.40
codegen_flags: <defaults>
</compile_context>

<pallas_src>
import math
import functools

import jax
import jax.numpy as jnp
from jax.experimental import pallas as pl
from jax.experimental.pallas import tpu as pltpu


def _split_heads(x, heads, d_k):
    """(rows, heads*d_k) -> (heads, rows, d_k) via static lane slices.

    Avoids a generic lane-splitting reshape; the stack is a leading-axis
    concatenate, which Mosaic lowers cleanly."""
    return jnp.stack([x[:, h * d_k:(h + 1) * d_k] for h in range(heads)],
                     axis=0)


def _merge_heads(x, heads):
    """(heads, rows, d_k) -> (rows, heads*d_k) via a lane-axis concatenate."""
    return jnp.concatenate([x[h] for h in range(heads)], axis=-1)


def _mha_kernel(q_ref, k_ref, v_ref,
                wq_ref, bq_ref, wk_ref, bk_ref, wv_ref, bv_ref,
                wo_ref, bo_ref,
                out_ref,
                q_scratch, m_scratch, l_scratch, acc_scratch,
                *, heads, d_k, scale, compute_dtype):
    """One grid step = (batch element, query tile, key tile).

    q_ref           : (block_q, d_model)  compute dtype
    k_ref / v_ref   : (block_k, d_model)  compute dtype
    w*_ref          : (d_model, d_model)  compute dtype, pre-transposed (y = x @ W)
    b*_ref          : (1, d_model)        f32
    out_ref         : (block_q, d_model)  f32
    q_scratch       : (heads, block_q, d_k)  projected & scaled q (compute dtype)
    m/l_scratch     : (heads, block_q, 1)    f32 online-softmax state
    acc_scratch     : (heads, block_q, d_k)  f32 PV accumulator
    """
    cd = compute_dtype
    f32 = jnp.float32
    kv_step = pl.program_id(2)
    last_kv = pl.num_programs(2) - 1

    @pl.when(kv_step == 0)
    def _init():
        # Project q for ALL heads with one lane-dense matmul (N = d_model),
        # fold the 1/sqrt(d_k) scale into q, park the per-head view in VMEM
        # scratch so it is reused for every key tile of this query tile.
        q_proj = (jnp.dot(q_ref[...], wq_ref[...],
                          preferred_element_type=f32) + bq_ref[...]) * scale
        q_scratch[...] = _split_heads(q_proj, heads, d_k).astype(cd)
        m_scratch[...] = jnp.full_like(m_scratch, -jnp.inf)
        l_scratch[...] = jnp.zeros_like(l_scratch)
        acc_scratch[...] = jnp.zeros_like(acc_scratch)

    # K/V projections for this key tile (all heads fused, lane-dense N).
    k_proj = jnp.dot(k_ref[...], wk_ref[...],
                     preferred_element_type=f32) + bk_ref[...]
    v_proj = jnp.dot(v_ref[...], wv_ref[...],
                     preferred_element_type=f32) + bv_ref[...]
    k3 = _split_heads(k_proj, heads, d_k).astype(cd)    # (heads, block_k, d_k)
    v3 = _split_heads(v_proj, heads, d_k).astype(cd)

    # Head-batched scores: back-to-back MXU pushes, f32 accumulation.
    s = jnp.einsum("hqd,hkd->hqk", q_scratch[...], k3,
                   preferred_element_type=f32)          # (heads, block_q, block_k)

    # Online softmax over keys (torch Softmax(dim=1)), f32 math.
    m_prev = m_scratch[...]
    m_new = jnp.maximum(m_prev, jnp.max(s, axis=-1, keepdims=True))
    alpha = jnp.exp(m_prev - m_new)
    p = jnp.exp(s - m_new)
    l_scratch[...] = alpha * l_scratch[...] + jnp.sum(p, axis=-1, keepdims=True)
    acc_scratch[...] = alpha * acc_scratch[...] + jnp.einsum(
        "hqk,hkd->hqd", p.astype(cd), v3, preferred_element_type=f32)
    m_scratch[...] = m_new

    @pl.when(kv_step == last_kv)
    def _finalize():
        inv_l = pl.reciprocal(l_scratch[...], approx=True)      # EUP slot
        ctx = (acc_scratch[...] * inv_l).astype(cd)              # (h, q, d_k)
        x = _merge_heads(ctx, heads)                             # (q, d_model)
        out = jnp.dot(x, wo_ref[...], preferred_element_type=f32) + bo_ref[...]
        out_ref[...] = out.astype(out_ref.dtype)


def _vmem_capacity_bytes():
    try:
        cap = getattr(pltpu.get_tpu_info(), "vmem_capacity_bytes", None)
        if cap:
            return int(cap)
    except Exception:
        pass
    return 128 * 1024 * 1024        # v5e / v6e default


def _resident_spec(block_shape, index_map):
    """Constant-index (VMEM-resident) input; single-buffered when supported."""
    try:
        return pl.BlockSpec(block_shape, index_map,
                            pipeline_mode=pl.Buffered(1))
    except (TypeError, ValueError):
        return pl.BlockSpec(block_shape, index_map)


def _pick_blocks(seq_q, seq_k, batch, d_model, heads, itemsize, vmem_budget,
                 cap=512):
    """Largest (block_q, block_k) divisors whose estimated VMEM footprint fits
    the budget; prefers an even number of parallel grid steps (v7x megacore)
    when that costs at most half the query tile."""
    f32b = 4

    def divisors_desc(n):
        return [d for d in range(min(n, cap), 0, -1) if n % d == 0]

    def fits(bq, bk):
        est = 2 * bq * d_model * itemsize           # q tile (double-buffered)
        est += 2 * bq * d_model * f32b              # out tile
        est += 2 * 2 * bk * d_model * itemsize      # k & v tiles
        est += 4 * d_model * d_model * itemsize     # resident weights
        est += bq * d_model * (itemsize + f32b)     # q / acc scratch
        est += 2 * heads * bq * 128 * f32b          # m / l scratch (lane-padded)
        est += 3 * bk * d_model * f32b              # k/v projections + views
        est += 2 * heads * bq * bk * f32b           # scores + exp
        est += 2 * bq * d_model * f32b              # q projection / merged ctx
        return est <= vmem_budget

    q_divs = divisors_desc(seq_q)
    k_divs = divisors_desc(seq_k)

    def first_fit(q_candidates):
        for bq in q_candidates:
            for bk in k_divs:
                if fits(bq, bk):
                    return bq, bk
        return None

    best = first_fit(q_divs)
    if best is None:
        return q_divs[-1], k_divs[-1]               # best effort
    if (batch * (seq_q // best[0])) % 2 != 0:       # v7x: even parallel steps
        even = first_fit([bq for bq in q_divs
                          if bq >= best[0] // 2
                          and (batch * (seq_q // bq)) % 2 == 0])
        if even is not None:
            return even
    return best


def multi_head_attention(query, key, value, params, *, heads,
                         compute_dtype=jnp.bfloat16,
                         block_q=None, block_k=None):
    """query/key/value: (seq_len, batch, d_model) f32 (PyTorch layout).

    compute_dtype: dtype of MXU operands and of Q/K/V/weight tiles held in
    VMEM (accumulation and softmax are always f32).  bf16 is the default on
    every generation (the MXU is bf16-native even on v5e); use f32 only for
    bit-tight parity checks.
    """
    seq_q, batch, d_model = query.shape
    seq_k = key.shape[0]
    assert d_model % heads == 0
    d_k = d_model // heads
    scale = 1.0 / math.sqrt(d_k)
    cd = compute_dtype
    itemsize = jnp.dtype(cd).itemsize

    # VMEM budget per generation: scoped limit at 3/4 of physical VMEM
    # (~48 MiB on v7x, ~96 MiB on v5e/v6e); tiles are sized to fit inside it.
    vmem_limit = min((3 * _vmem_capacity_bytes()) // 4, 100 * 1024 * 1024)
    auto_bq, auto_bk = _pick_blocks(seq_q, seq_k, batch, d_model, heads,
                                    itemsize, int(0.85 * vmem_limit))
    block_q = auto_bq if block_q is None else block_q
    block_k = auto_bk if block_k is None else block_k
    assert seq_q % block_q == 0 and seq_k % block_k == 0

    # Host-side layout fixes (cheap XLA copies, big in-kernel savings):
    #   * batch leading -> lane-dense (rows, d_model) tiles, no sublane padding
    #   * inputs/weights cast to compute dtype -> half the HBM/VMEM traffic
    #   * weights pre-transposed -> kernel computes x @ W, no in-kernel .T
    q_in = jnp.swapaxes(query, 0, 1).astype(cd)
    k_in = jnp.swapaxes(key, 0, 1).astype(cd)
    v_in = jnp.swapaxes(value, 0, 1).astype(cd)
    wq_t = params["wq"].T.astype(cd)
    wk_t = params["wk"].T.astype(cd)
    wv_t = params["wv"].T.astype(cd)
    wo_t = params["wo"].T.astype(cd)
    bias_q = params["bq"].reshape(1, d_model).astype(jnp.float32)
    bias_k = params["bk"].reshape(1, d_model).astype(jnp.float32)
    bias_v = params["bv"].reshape(1, d_model).astype(jnp.float32)
    bias_o = params["bo"].reshape(1, d_model).astype(jnp.float32)

    grid = (batch, seq_q // block_q, seq_k // block_k)

    q_spec = pl.BlockSpec((None, block_q, d_model), lambda b, i, j: (b, i, 0))
    kv_spec = pl.BlockSpec((None, block_k, d_model), lambda b, i, j: (b, j, 0))
    w_spec = _resident_spec((d_model, d_model), lambda b, i, j: (0, 0))
    bias_spec = _resident_spec((1, d_model), lambda b, i, j: (0, 0))
    out_spec = pl.BlockSpec((None, block_q, d_model), lambda b, i, j: (b, i, 0))

    kernel = functools.partial(_mha_kernel, heads=heads, d_k=d_k, scale=scale,
                               compute_dtype=cd)

    out = pl.pallas_call(
        kernel,
        # Output stays f32 for exact parity with the torch module; emit bf16
        # here if the consumer accepts it (halves writeback HBM traffic).
        out_shape=jax.ShapeDtypeStruct((batch, seq_q, d_model), jnp.float32),
        grid_spec=pltpu.PrefetchScalarGridSpec(
            num_scalar_prefetch=0,
            grid=grid,
            in_specs=[q_spec, kv_spec, kv_spec,
                      w_spec, bias_spec, w_spec, bias_spec, w_spec, bias_spec,
                      w_spec, bias_spec],
            out_specs=out_spec,
            scratch_shapes=[
                pltpu.VMEM((heads, block_q, d_k), cd),           # projected q
                pltpu.VMEM((heads, block_q, 1), jnp.float32),    # running max
                pltpu.VMEM((heads, block_q, 1), jnp.float32),    # running sum
                pltpu.VMEM((heads, block_q, d_k), jnp.float32),  # PV accum
            ]),
        compiler_params=pltpu.CompilerParams(
            dimension_semantics=("parallel", "parallel", "arbitrary"),
            vmem_limit_bytes=int(vmem_limit)),
    )(q_in, k_in, v_in,
      wq_t, bias_q, wk_t, bias_k, wv_t, bias_v, wo_t, bias_o)

    return jnp.swapaxes(out, 0, 1)       # back to (seq, batch, d_model)


def reference_mha(query, key, value, params, *, heads):
    """Pure-JAX f32 reference mirroring the PyTorch module (dropout = identity)."""
    seq_len, batch, d_model = query.shape
    d_k = d_model // heads
    scale = 1.0 / math.sqrt(d_k)

    def proj(x, w, b):
        y = x @ w.T + b
        return y.reshape(*x.shape[:-1], heads, d_k)

    q = proj(query, params["wq"], params["bq"])
    k = proj(key, params["wk"], params["bk"])
    v = proj(value, params["wv"], params["bv"])
    scores = jnp.einsum("ibhd,jbhd->ijbh", q, k) * scale
    attn = jax.nn.softmax(scores, axis=1)
    x = jnp.einsum("ijbh,jbhd->ibhd", attn, v)
    x = x.reshape(seq_len, batch, d_model)
    return x @ params["wo"].T + params["bo"]


if __name__ == "__main__":
    seq_len, batch, d_model, heads = 8, 2, 32, 4

    key0 = jax.random.PRNGKey(0)
    ks = jax.random.split(key0, 11)
    s = 0.05
    params = {
        "wq": jax.random.normal(ks[0], (d_model, d_model), jnp.float32) * s,
        "bq": jax.random.normal(ks[1], (d_model,), jnp.float32) * s,
        "wk": jax.random.normal(ks[2], (d_model, d_model), jnp.float32) * s,
        "bk": jax.random.normal(ks[3], (d_model,), jnp.float32) * s,
        "wv": jax.random.normal(ks[4], (d_model, d_model), jnp.float32) * s,
        "bv": jax.random.normal(ks[5], (d_model,), jnp.float32) * s,
        "wo": jax.random.normal(ks[6], (d_model, d_model), jnp.float32) * s,
        "bo": jax.random.normal(ks[7], (d_model,), jnp.float32) * s,
    }

    query = jax.random.normal(ks[8], (seq_len, batch, d_model), jnp.float32)
    key_in = jax.random.normal(ks[9], (seq_len, batch, d_model), jnp.float32)
    value = jax.random.normal(ks[10], (seq_len, batch, d_model), jnp.float32)

    ref = reference_mha(query, key_in, value, params, heads=heads)

    # f32 operand path (tight check; tolerance covers only the approx vrcp).
    out_f32 = multi_head_attention(query, key_in, value, params, heads=heads,
                                   compute_dtype=jnp.float32)
    out_f32 = jax.block_until_ready(out_f32)
    assert out_f32.shape == (seq_len, batch, d_model)
    assert jnp.allclose(out_f32, ref, atol=5e-3, rtol=5e-3), \
        f"f32 path max abs err {jnp.max(jnp.abs(out_f32 - ref))}"

    # Default bf16 operand path (MXU-native on v5e/v6e/v7x; f32 accumulation).
    out_bf16 = multi_head_attention(query, key_in, value, params, heads=heads)
    out_bf16 = jax.block_until_ready(out_bf16)
    assert out_bf16.shape == (seq_len, batch, d_model)
    assert jnp.allclose(out_bf16, ref, atol=5e-2, rtol=5e-2), \
        f"bf16 path max abs err {jnp.max(jnp.abs(out_bf16 - ref))}"

    print("KERNEL_OK")
</pallas_src>

<mosaic_0001>
module attributes {stable_mosaic.version = 11 : i64} {
  func.func @_mha_kernel(%arg0: i32, %arg1: i32, %arg2: i32, %arg3: memref<1x8x32xf32, #tpu.memory_space<vmem>>, %arg4: memref<1x8x32xf32, #tpu.memory_space<vmem>>, %arg5: memref<1x8x32xf32, #tpu.memory_space<vmem>>, %arg6: memref<32x32xf32, #tpu.memory_space<vmem>>, %arg7: memref<1x32xf32, #tpu.memory_space<vmem>>, %arg8: memref<32x32xf32, #tpu.memory_space<vmem>>, %arg9: memref<1x32xf32, #tpu.memory_space<vmem>>, %arg10: memref<32x32xf32, #tpu.memory_space<vmem>>, %arg11: memref<1x32xf32, #tpu.memory_space<vmem>>, %arg12: memref<32x32xf32, #tpu.memory_space<vmem>>, %arg13: memref<1x32xf32, #tpu.memory_space<vmem>>, %arg14: memref<1x8x32xf32, #tpu.memory_space<vmem>>, %arg15: memref<4x8x8xf32, #tpu.memory_space<vmem>>, %arg16: memref<4x8x1xf32, #tpu.memory_space<vmem>>, %arg17: memref<4x8x1xf32, #tpu.memory_space<vmem>>, %arg18: memref<4x8x8xf32, #tpu.memory_space<vmem>>) attributes {dimension_semantics = [#tpu.dimension_semantics<parallel>, #tpu.dimension_semantics<parallel>, #tpu.dimension_semantics<arbitrary>], iteration_bounds = array<i64: 2, 1, 1>, scalar_prefetch = 0 : i64, scratch_operands = 4 : i64, tpu.core_type = #tpu.core_type<tc>, window_params = [{transform_indices = @transform_0, window_bounds = array<i64: 1, 8, 32>}, {transform_indices = @transform_1, window_bounds = array<i64: 1, 8, 32>}, {transform_indices = @transform_2, window_bounds = array<i64: 1, 8, 32>}, {pipeline_mode = #tpu.pipeline_mode<synchronous>, transform_indices = @transform_3, window_bounds = array<i64: 32, 32>}, {pipeline_mode = #tpu.pipeline_mode<synchronous>, transform_indices = @transform_4, window_bounds = array<i64: 1, 32>}, {pipeline_mode = #tpu.pipeline_mode<synchronous>, transform_indices = @transform_5, window_bounds = array<i64: 32, 32>}, {pipeline_mode = #tpu.pipeline_mode<synchronous>, transform_indices = @transform_6, window_bounds = array<i64: 1, 32>}, {pipeline_mode = #tpu.pipeline_mode<synchronous>, transform_indices = @transform_7, window_bounds = array<i64: 32, 32>}, {pipeline_mode = #tpu.pipeline_mode<synchronous>, transform_indices = @transform_8, window_bounds = array<i64: 1, 32>}, {pipeline_mode = #tpu.pipeline_mode<synchronous>, transform_indices = @transform_9, window_bounds = array<i64: 32, 32>}, {pipeline_mode = #tpu.pipeline_mode<synchronous>, transform_indices = @transform_10, window_bounds = array<i64: 1, 32>}, {transform_indices = @transform_11, window_bounds = array<i64: 1, 8, 32>}]} {
    %c0_i32 = arith.constant 0 : i32
    %0 = arith.cmpi eq, %arg2, %c0_i32 : i32
    %1 = arith.extui %0 : i1 to i32
    %c0_i32_0 = arith.constant 0 : i32
    %2 = arith.cmpi ne, %1, %c0_i32_0 : i32
    scf.if %2 {
      %c0_42 = arith.constant 0 : index
      %c0_43 = arith.constant 0 : index
      %c0_44 = arith.constant 0 : index
      %62 = vector.load %arg3[%c0_42, %c0_43, %c0_44] : memref<1x8x32xf32, #tpu.memory_space<vmem>>, vector<1x8x32xf32>
      %63 = vector.shape_cast %62 : vector<1x8x32xf32> to vector<8x32xf32>
      %c0_45 = arith.constant 0 : index
      %c0_46 = arith.constant 0 : index
      %64 = vector.load %arg6[%c0_45, %c0_46] : memref<32x32xf32, #tpu.memory_space<vmem>>, vector<32x32xf32>
      %cst_47 = arith.constant dense<0.000000e+00> : vector<8x32xf32>
      %65 = tpu.matmul %63, %64, %cst_47 {dimension_numbers = #tpu.dot_dimension_numbers<[1], [0], [0], [1], [0, 0, 1, 1], [], []>} : vector<8x32xf32>, vector<32x32xf32>, vector<8x32xf32> -> vector<8x32xf32>
      %c0_48 = arith.constant 0 : index
      %c0_49 = arith.constant 0 : index
      %66 = vector.load %arg7[%c0_48, %c0_49] : memref<1x32xf32, #tpu.memory_space<vmem>>, vector<1x32xf32>
      %67 = vector.broadcast %66 : vector<1x32xf32> to vector<8x32xf32>
      %68 = arith.addf %65, %67 : vector<8x32xf32>
      %cst_50 = arith.constant 0.353553385 : f32
      %69 = vector.broadcast %cst_50 : f32 to vector<8x32xf32>
      %70 = arith.mulf %68, %69 : vector<8x32xf32>
      %71 = vector.extract_strided_slice %70 {offsets = [0, 0], sizes = [8, 8], strides = [1, 1]} : vector<8x32xf32> to vector<8x8xf32>
      %72 = vector.extract_strided_slice %70 {offsets = [0, 8], sizes = [8, 8], strides = [1, 1]} : vector<8x32xf32> to vector<8x8xf32>
      %73 = vector.extract_strided_slice %70 {offsets = [0, 16], sizes = [8, 8], strides = [1, 1]} : vector<8x32xf32> to vector<8x8xf32>
      %74 = vector.extract_strided_slice %70 {offsets = [0, 24], sizes = [8, 8], strides = [1, 1]} : vector<8x32xf32> to vector<8x8xf32>
      %75 = vector.shape_cast %71 : vector<8x8xf32> to vector<1x8x8xf32>
      %76 = vector.shape_cast %72 : vector<8x8xf32> to vector<1x8x8xf32>
      %77 = vector.shape_cast %73 : vector<8x8xf32> to vector<1x8x8xf32>
      %78 = vector.shape_cast %74 : vector<8x8xf32> to vector<1x8x8xf32>
      %79 = tpu.concatenate %75, %76, %77, %78 in 0 : vector<1x8x8xf32>, vector<1x8x8xf32>, vector<1x8x8xf32>, vector<1x8x8xf32> -> vector<4x8x8xf32>
      %c0_51 = arith.constant 0 : index
      %c0_52 = arith.constant 0 : index
      %c0_53 = arith.constant 0 : index
      %80 = vector.load %arg15[%c0_51, %c0_52, %c0_53] : memref<4x8x8xf32, #tpu.memory_space<vmem>>, vector<4x8x8xf32>
      tpu.vector_store %arg15[%c0_51, %c0_52, %c0_53], %79 {strides = array<i32>} : memref<4x8x8xf32, #tpu.memory_space<vmem>>, vector<4x8x8xf32>,
      %cst_54 = arith.constant 0xFF800000 : f32
      %81 = vector.broadcast %cst_54 : f32 to vector<4x8x1xf32>
      %c0_55 = arith.constant 0 : index
      %c0_56 = arith.constant 0 : index
      %c0_57 = arith.constant 0 : index
      %82 = vector.load %arg16[%c0_55, %c0_56, %c0_57] : memref<4x8x1xf32, #tpu.memory_space<vmem>>, vector<4x8x1xf32>
      tpu.vector_store %arg16[%c0_55, %c0_56, %c0_57], %81 {strides = array<i32>} : memref<4x8x1xf32, #tpu.memory_space<vmem>>, vector<4x8x1xf32>,
      %cst_58 = arith.constant 0.000000e+00 : f32
      %83 = vector.broadcast %cst_58 : f32 to vector<4x8x1xf32>
      %c0_59 = arith.constant 0 : index
      %c0_60 = arith.constant 0 : index
      %c0_61 = arith.constant 0 : index
      %84 = vector.load %arg17[%c0_59, %c0_60, %c0_61] : memref<4x8x1xf32, #tpu.memory_space<vmem>>, vector<4x8x1xf32>
      tpu.vector_store %arg17[%c0_59, %c0_60, %c0_61], %83 {strides = array<i32>} : memref<4x8x1xf32, #tpu.memory_space<vmem>>, vector<4x8x1xf32>,
      %cst_62 = arith.constant 0.000000e+00 : f32
      %85 = vector.broadcast %cst_62 : f32 to vector<4x8x8xf32>
      %c0_63 = arith.constant 0 : index
      %c0_64 = arith.constant 0 : index
      %c0_65 = arith.constant 0 : index
      %86 = vector.load %arg18[%c0_63, %c0_64, %c0_65] : memref<4x8x8xf32, #tpu.memory_space<vmem>>, vector<4x8x8xf32>
      tpu.vector_store %arg18[%c0_63, %c0_64, %c0_65], %85 {strides = array<i32>} : memref<4x8x8xf32, #tpu.memory_space<vmem>>, vector<4x8x8xf32>,
    } else {
    }
    %c0 = arith.constant 0 : index
    %c0_1 = arith.constant 0 : index
    %c0_2 = arith.constant 0 : index
    %3 = vector.load %arg4[%c0, %c0_1, %c0_2] : memref<1x8x32xf32, #tpu.memory_space<vmem>>, vector<1x8x32xf32>
    %4 = vector.shape_cast %3 : vector<1x8x32xf32> to vector<8x32xf32>
    %c0_3 = arith.constant 0 : index
    %c0_4 = arith.constant 0 : index
    %5 = vector.load %arg8[%c0_3, %c0_4] : memref<32x32xf32, #tpu.memory_space<vmem>>, vector<32x32xf32>
    %cst = arith.constant dense<0.000000e+00> : vector<8x32xf32>
    %6 = tpu.matmul %4, %5, %cst {dimension_numbers = #tpu.dot_dimension_numbers<[1], [0], [0], [1], [0, 0, 1, 1], [], []>} : vector<8x32xf32>, vector<32x32xf32>, vector<8x32xf32> -> vector<8x32xf32>
    %c0_5 = arith.constant 0 : index
    %c0_6 = arith.constant 0 : index
    %7 = vector.load %arg9[%c0_5, %c0_6] : memref<1x32xf32, #tpu.memory_space<vmem>>, vector<1x32xf32>
    %8 = vector.broadcast %7 : vector<1x32xf32> to vector<8x32xf32>
    %9 = arith.addf %6, %8 : vector<8x32xf32>
    %c0_7 = arith.constant 0 : index
    %c0_8 = arith.constant 0 : index
    %c0_9 = arith.constant 0 : index
    %10 = vector.load %arg5[%c0_7, %c0_8, %c0_9] : memref<1x8x32xf32, #tpu.memory_space<vmem>>, vector<1x8x32xf32>
    %11 = vector.shape_cast %10 : vector<1x8x32xf32> to vector<8x32xf32>
    %c0_10 = arith.constant 0 : index
    %c0_11 = arith.constant 0 : index
    %12 = vector.load %arg10[%c0_10, %c0_11] : memref<32x32xf32, #tpu.memory_space<vmem>>, vector<32x32xf32>
    %cst_12 = arith.constant dense<0.000000e+00> : vector<8x32xf32>
    %13 = tpu.matmul %11, %12, %cst_12 {dimension_numbers = #tpu.dot_dimension_numbers<[1], [0], [0], [1], [0, 0, 1, 1], [], []>} : vector<8x32xf32>, vector<32x32xf32>, vector<8x32xf32> -> vector<8x32xf32>
    %c0_13 = arith.constant 0 : index
    %c0_14 = arith.constant 0 : index
    %14 = vector.load %arg11[%c0_13, %c0_14] : memref<1x32xf32, #tpu.memory_space<vmem>>, vector<1x32xf32>
    %15 = vector.broadcast %14 : vector<1x32xf32> to vector<8x32xf32>
    %16 = arith.addf %13, %15 : vector<8x32xf32>
    %17 = vector.extract_strided_slice %9 {offsets = [0, 0], sizes = [8, 8], strides = [1, 1]} : vector<8x32xf32> to vector<8x8xf32>
    %18 = vector.extract_strided_slice %9 {offsets = [0, 8], sizes = [8, 8], strides = [1, 1]} : vector<8x32xf32> to vector<8x8xf32>
    %19 = vector.extract_strided_slice %9 {offsets = [0, 16], sizes = [8, 8], strides = [1, 1]} : vector<8x32xf32> to vector<8x8xf32>
    %20 = vector.extract_strided_slice %9 {offsets = [0, 24], sizes = [8, 8], strides = [1, 1]} : vector<8x32xf32> to vector<8x8xf32>
    %21 = vector.shape_cast %17 : vector<8x8xf32> to vector<1x8x8xf32>
    %22 = vector.shape_cast %18 : vector<8x8xf32> to vector<1x8x8xf32>
    %23 = vector.shape_cast %19 : vector<8x8xf32> to vector<1x8x8xf32>
    %24 = vector.shape_cast %20 : vector<8x8xf32> to vector<1x8x8xf32>
    %25 = tpu.concatenate %21, %22, %23, %24 in 0 : vector<1x8x8xf32>, vector<1x8x8xf32>, vector<1x8x8xf32>, vector<1x8x8xf32> -> vector<4x8x8xf32>
    %26 = vector.extract_strided_slice %16 {offsets = [0, 0], sizes = [8, 8], strides = [1, 1]} : vector<8x32xf32> to vector<8x8xf32>
    %27 = vector.extract_strided_slice %16 {offsets = [0, 8], sizes = [8, 8], strides = [1, 1]} : vector<8x32xf32> to vector<8x8xf32>
    %28 = vector.extract_strided_slice %16 {offsets = [0, 16], sizes = [8, 8], strides = [1, 1]} : vector<8x32xf32> to vector<8x8xf32>
    %29 = vector.extract_strided_slice %16 {offsets = [0, 24], sizes = [8, 8], strides = [1, 1]} : vector<8x32xf32> to vector<8x8xf32>
    %30 = vector.shape_cast %26 : vector<8x8xf32> to vector<1x8x8xf32>
    %31 = vector.shape_cast %27 : vector<8x8xf32> to vector<1x8x8xf32>
    %32 = vector.shape_cast %28 : vector<8x8xf32> to vector<1x8x8xf32>
    %33 = vector.shape_cast %29 : vector<8x8xf32> to vector<1x8x8xf32>
    %34 = tpu.concatenate %30, %31, %32, %33 in 0 : vector<1x8x8xf32>, vector<1x8x8xf32>, vector<1x8x8xf32>, vector<1x8x8xf32> -> vector<4x8x8xf32>
    %c0_15 = arith.constant 0 : index
    %c0_16 = arith.constant 0 : index
    %c0_17 = arith.constant 0 : index
    %35 = vector.load %arg15[%c0_15, %c0_16, %c0_17] : memref<4x8x8xf32, #tpu.memory_space<vmem>>, vector<4x8x8xf32>
    "tpu.trace_start"() <{level = 10 : i32, message = "hqd,hkd->hqk"}> : () -> ()
    %cst_18 = arith.constant dense<0.000000e+00> : vector<4x8x8xf32>
    %36 = tpu.matmul %35, %25, %cst_18 {dimension_numbers = #tpu.dot_dimension_numbers<[2], [2], [1], [1], [0, 0, 0, 1, 1, 1], [0], [0]>} : vector<4x8x8xf32>, vector<4x8x8xf32>, vector<4x8x8xf32> -> vector<4x8x8xf32>
    "tpu.trace_stop"() : () -> ()
    %c0_19 = arith.constant 0 : index
    %c0_20 = arith.constant 0 : index
    %c0_21 = arith.constant 0 : index
    %37 = vector.load %arg16[%c0_19, %c0_20, %c0_21] : memref<4x8x1xf32, #tpu.memory_space<vmem>>, vector<4x8x1xf32>
    %cst_22 = arith.constant dense<0xFF800000> : vector<4x8xf32>
    %38 = vector.multi_reduction <maximumf>, %36, %cst_22 [2] : vector<4x8x8xf32> to vector<4x8xf32>
    %39 = vector.shape_cast %38 : vector<4x8xf32> to vector<4x8x1xf32>
    %40 = arith.maximumf %37, %39 : vector<4x8x1xf32>
    %41 = arith.subf %37, %40 : vector<4x8x1xf32>
    %42 = math.exp %41 : vector<4x8x1xf32>
    %43 = vector.broadcast %40 : vector<4x8x1xf32> to vector<4x8x8xf32>
    %44 = arith.subf %36, %43 : vector<4x8x8xf32>
    %45 = math.exp %44 : vector<4x8x8xf32>
    %c0_23 = arith.constant 0 : index
    %c0_24 = arith.constant 0 : index
    %c0_25 = arith.constant 0 : index
    %46 = vector.load %arg17[%c0_23, %c0_24, %c0_25] : memref<4x8x1xf32, #tpu.memory_space<vmem>>, vector<4x8x1xf32>
    %47 = arith.mulf %42, %46 : vector<4x8x1xf32>
    %cst_26 = arith.constant dense<0.000000e+00> : vector<4x8xf32>
    %48 = vector.multi_reduction <add>, %45, %cst_26 [2] : vector<4x8x8xf32> to vector<4x8xf32>
    %49 = vector.shape_cast %48 : vector<4x8xf32> to vector<4x8x1xf32>
    %50 = arith.addf %47, %49 : vector<4x8x1xf32>
    %c0_27 = arith.constant 0 : index
    %c0_28 = arith.constant 0 : index
    %c0_29 = arith.constant 0 : index
    %51 = vector.load %arg17[%c0_27, %c0_28, %c0_29] : memref<4x8x1xf32, #tpu.memory_space<vmem>>, vector<4x8x1xf32>
    tpu.vector_store %arg17[%c0_27, %c0_28, %c0_29], %50 {strides = array<i32>} : memref<4x8x1xf32, #tpu.memory_space<vmem>>, vector<4x8x1xf32>,
    %c0_30 = arith.constant 0 : index
    %c0_31 = arith.constant 0 : index
    %c0_32 = arith.constant 0 : index
    %52 = vector.load %arg18[%c0_30, %c0_31, %c0_32] : memref<4x8x8xf32, #tpu.memory_space<vmem>>, vector<4x8x8xf32>
    %53 = vector.broadcast %42 : vector<4x8x1xf32> to vector<4x8x8xf32>
    %54 = arith.mulf %53, %52 : vector<4x8x8xf32>
    "tpu.trace_start"() <{level = 10 : i32, message = "hqk,hkd->hqd"}> : () -> ()
    %cst_33 = arith.constant dense<0.000000e+00> : vector<4x8x8xf32>
    %55 = tpu.matmul %45, %34, %cst_33 {dimension_numbers = #tpu.dot_dimension_numbers<[2], [1], [1], [2], [0, 0, 0, 1, 1, 2], [0], [0]>} : vector<4x8x8xf32>, vector<4x8x8xf32>, vector<4x8x8xf32> -> vector<4x8x8xf32>
    "tpu.trace_stop"() : () -> ()
    %56 = arith.addf %54, %55 : vector<4x8x8xf32>
    %c0_34 = arith.constant 0 : index
    %c0_35 = arith.constant 0 : index
    %c0_36 = arith.constant 0 : index
    %57 = vector.load %arg18[%c0_34, %c0_35, %c0_36] : memref<4x8x8xf32, #tpu.memory_space<vmem>>, vector<4x8x8xf32>
    tpu.vector_store %arg18[%c0_34, %c0_35, %c0_36], %56 {strides = array<i32>} : memref<4x8x8xf32, #tpu.memory_space<vmem>>, vector<4x8x8xf32>,
    %c0_37 = arith.constant 0 : index
    %c0_38 = arith.constant 0 : index
    %c0_39 = arith.constant 0 : index
    %58 = vector.load %arg16[%c0_37, %c0_38, %c0_39] : memref<4x8x1xf32, #tpu.memory_space<vmem>>, vector<4x8x1xf32>
    tpu.vector_store %arg16[%c0_37, %c0_38, %c0_39], %40 {strides = array<i32>} : memref<4x8x1xf32, #tpu.memory_space<vmem>>, vector<4x8x1xf32>,
    %c0_i32_40 = arith.constant 0 : i32
    %59 = arith.cmpi eq, %arg2, %c0_i32_40 : i32
    %60 = arith.extui %59 : i1 to i32
    %c0_i32_41 = arith.constant 0 : i32
    %61 = arith.cmpi ne, %60, %c0_i32_41 : i32
    scf.if %61 {
      %c0_42 = arith.constant 0 : index
      %c0_43 = arith.constant 0 : index
      %c0_44 = arith.constant 0 : index
      %62 = vector.load %arg17[%c0_42, %c0_43, %c0_44] : memref<4x8x1xf32, #tpu.memory_space<vmem>>, vector<4x8x1xf32>
      %63 = tpu.reciprocal %62 {approx = true} : vector<4x8x1xf32> -> vector<4x8x1xf32>
      %c0_45 = arith.constant 0 : index
      %c0_46 = arith.constant 0 : index
      %c0_47 = arith.constant 0 : index
      %64 = vector.load %arg18[%c0_45, %c0_46, %c0_47] : memref<4x8x8xf32, #tpu.memory_space<vmem>>, vector<4x8x8xf32>
      %65 = vector.broadcast %63 : vector<4x8x1xf32> to vector<4x8x8xf32>
      %66 = arith.mulf %64, %65 : vector<4x8x8xf32>
      %67 = vector.extract_strided_slice %66 {offsets = [0, 0, 0], sizes = [1, 8, 8], strides = [1, 1, 1]} : vector<4x8x8xf32> to vector<1x8x8xf32>
      %68 = vector.shape_cast %67 : vector<1x8x8xf32> to vector<8x8xf32>
      %69 = vector.extract_strided_slice %66 {offsets = [1, 0, 0], sizes = [1, 8, 8], strides = [1, 1, 1]} : vector<4x8x8xf32> to vector<1x8x8xf32>
      %70 = vector.shape_cast %69 : vector<1x8x8xf32> to vector<8x8xf32>
      %71 = vector.extract_strided_slice %66 {offsets = [2, 0, 0], sizes = [1, 8, 8], strides = [1, 1, 1]} : vector<4x8x8xf32> to vector<1x8x8xf32>
      %72 = vector.shape_cast %71 : vector<1x8x8xf32> to vector<8x8xf32>
      %73 = vector.extract_strided_slice %66 {offsets = [3, 0, 0], sizes = [1, 8, 8], strides = [1, 1, 1]} : vector<4x8x8xf32> to vector<1x8x8xf32>
      %74 = vector.shape_cast %73 : vector<1x8x8xf32> to vector<8x8xf32>
      %75 = tpu.concatenate %68, %70, %72, %74 in 1 : vector<8x8xf32>, vector<8x8xf32>, vector<8x8xf32>, vector<8x8xf32> -> vector<8x32xf32>
      %c0_48 = arith.constant 0 : index
      %c0_49 = arith.constant 0 : index
      %76 = vector.load %arg12[%c0_48, %c0_49] : memref<32x32xf32, #tpu.memory_space<vmem>>, vector<32x32xf32>
      %cst_50 = arith.constant dense<0.000000e+00> : vector<8x32xf32>
      %77 = tpu.matmul %75, %76, %cst_50 {dimension_numbers = #tpu.dot_dimension_numbers<[1], [0], [0], [1], [0, 0, 1, 1], [], []>} : vector<8x32xf32>, vector<32x32xf32>, vector<8x32xf32> -> vector<8x32xf32>
      %c0_51 = arith.constant 0 : index
      %c0_52 = arith.constant 0 : index
      %78 = vector.load %arg13[%c0_51, %c0_52] : memref<1x32xf32, #tpu.memory_space<vmem>>, vector<1x32xf32>
      %79 = vector.broadcast %78 : vector<1x32xf32> to vector<8x32xf32>
      %80 = arith.addf %77, %79 : vector<8x32xf32>
      %c0_53 = arith.constant 0 : index
      %c0_54 = arith.constant 0 : index
      %c0_55 = arith.constant 0 : index
      %81 = vector.load %arg14[%c0_53, %c0_54, %c0_55] : memref<1x8x32xf32, #tpu.memory_space<vmem>>, vector<1x8x32xf32>
      %82 = vector.shape_cast %81 : vector<1x8x32xf32> to vector<8x32xf32>
      %83 = vector.shape_cast %80 : vector<8x32xf32> to vector<1x8x32xf32>
      tpu.vector_store %arg14[%c0_53, %c0_54, %c0_55], %83 {strides = array<i32>} : memref<1x8x32xf32, #tpu.memory_space<vmem>>, vector<1x8x32xf32>,
    } else {
    }
    return
  }
  func.func @transform_0(%arg0: i32, %arg1: i32, %arg2: i32) -> (i32, i32, i32) {
    %c0_i32 = arith.constant 0 : i32
    %c0_i32_0 = arith.constant 0 : i32
    return %arg0, %arg1, %c0_i32 : i32, i32, i32
  }
  func.func @transform_1(%arg0: i32, %arg1: i32, %arg2: i32) -> (i32, i32, i32) {
    %c0_i32 = arith.constant 0 : i32
    %c0_i32_0 = arith.constant 0 : i32
    return %arg0, %arg2, %c0_i32 : i32, i32, i32
  }
  func.func @transform_2(%arg0: i32, %arg1: i32, %arg2: i32) -> (i32, i32, i32) {
    %c0_i32 = arith.constant 0 : i32
    %c0_i32_0 = arith.constant 0 : i32
    return %arg0, %arg2, %c0_i32 : i32, i32, i32
  }
  func.func @transform_3(%arg0: i32, %arg1: i32, %arg2: i32) -> (i32, i32) {
    %c0_i32 = arith.constant 0 : i32
    %c0_i32_0 = arith.constant 0 : i32
    %c0_i32_1 = arith.constant 0 : i32
    return %c0_i32, %c0_i32_0 : i32, i32
  }
  func.func @transform_4(%arg0: i32, %arg1: i32, %arg2: i32) -> (i32, i32) {
    %c0_i32 = arith.constant 0 : i32
    %c0_i32_0 = arith.constant 0 : i32
    %c0_i32_1 = arith.constant 0 : i32
    return %c0_i32, %c0_i32_0 : i32, i32
  }
  func.func @transform_5(%arg0: i32, %arg1: i32, %arg2: i32) -> (i32, i32) {
    %c0_i32 = arith.constant 0 : i32
    %c0_i32_0 = arith.constant 0 : i32
    %c0_i32_1 = arith.constant 0 : i32
    return %c0_i32, %c0_i32_0 : i32, i32
  }
  func.func @transform_6(%arg0: i32, %arg1: i32, %arg2: i32) -> (i32, i32) {
    %c0_i32 = arith.constant 0 : i32
    %c0_i32_0 = arith.constant 0 : i32
    %c0_i32_1 = arith.constant 0 : i32
    return %c0_i32, %c0_i32_0 : i32, i32
  }
  func.func @transform_7(%arg0: i32, %arg1: i32, %arg2: i32) -> (i32, i32) {
    %c0_i32 = arith.constant 0 : i32
    %c0_i32_0 = arith.constant 0 : i32
    %c0_i32_1 = arith.constant 0 : i32
    return %c0_i32, %c0_i32_0 : i32, i32
  }
  func.func @transform_8(%arg0: i32, %arg1: i32, %arg2: i32) -> (i32, i32) {
    %c0_i32 = arith.constant 0 : i32
    %c0_i32_0 = arith.constant 0 : i32
    %c0_i32_1 = arith.constant 0 : i32
    return %c0_i32, %c0_i32_0 : i32, i32
  }
  func.func @transform_9(%arg0: i32, %arg1: i32, %arg2: i32) -> (i32, i32) {
    %c0_i32 = arith.constant 0 : i32
    %c0_i32_0 = arith.constant 0 : i32
    %c0_i32_1 = arith.constant 0 : i32
    return %c0_i32, %c0_i32_0 : i32, i32
  }
  func.func @transform_10(%arg0: i32, %arg1: i32, %arg2: i32) -> (i32, i32) {
    %c0_i32 = arith.constant 0 : i32
    %c0_i32_0 = arith.constant 0 : i32
    %c0_i32_1 = arith.constant 0 : i32
    return %c0_i32, %c0_i32_0 : i32, i32
  }
  func.func @transform_11(%arg0: i32, %arg1: i32, %arg2: i32) -> (i32, i32, i32) {
    %c0_i32 = arith.constant 0 : i32
    %c0_i32_0 = arith.constant 0 : i32
    return %arg0, %arg1, %c0_i32 : i32, i32, i32
  }
}

</mosaic_0001>

<llo_original>
// kernel: tpu_custom_call.1
$region0: #{tpu_custom_call.1}
  #allocation0 [shape = 'u32[]', space=smem, size = 0x4, offset = 0x4, fixed_abs, tag = 'smem constant byte address 0x4 - core index']
  #allocation1 [shape = 'u32[144,128]{1,0:T(1,128)}', space=vmem, size = 0x12000, scoped, tag = 'internal scratch']
  #allocation2 [shape = 'f32[4,8,8]{2,1,0:T(8,128)}', space=vmem, size = 0x4000, scoped, tag = 'scratch operand']
  #allocation3 [shape = 'f32[4,8,1]{2,1,0:T(8,128)}', space=vmem, size = 0x4000, scoped, tag = 'scratch operand']
  #allocation4 [shape = 'f32[4,8,1]{2,1,0:T(8,128)}', space=vmem, size = 0x4000, scoped, tag = 'scratch operand']
  #allocation5 [shape = 'f32[4,8,8]{2,1,0:T(8,128)}', space=vmem, size = 0x4000, scoped, tag = 'scratch operand']
  %s0 = inlined_call_operand.hbm [shape: f32[2,8,32], index: 0, kind: input, shape index: {}]
  %s1 = inlined_call_operand.hbm [shape: f32[2,8,32], index: 1, kind: input, shape index: {}]
  %s2 = inlined_call_operand.hbm [shape: f32[2,8,32], index: 2, kind: input, shape index: {}]
  %s3 = inlined_call_operand.hbm [shape: f32[32,32], index: 3, kind: input, shape index: {}]
  %s4 = inlined_call_operand.vmem [shape: f32[1,32], index: 4, kind: input, shape index: {}]
  %s5 = inlined_call_operand.hbm [shape: f32[32,32], index: 5, kind: input, shape index: {}]
  %s6 = inlined_call_operand.vmem [shape: f32[1,32], index: 6, kind: input, shape index: {}]
  %s7 = inlined_call_operand.hbm [shape: f32[32,32], index: 7, kind: input, shape index: {}]
  %s8 = inlined_call_operand.vmem [shape: f32[1,32], index: 8, kind: input, shape index: {}]
  %s9 = inlined_call_operand.hbm [shape: f32[32,32], index: 9, kind: input, shape index: {}]
  %s10 = inlined_call_operand.vmem [shape: f32[1,32], index: 10, kind: input, shape index: {}]
  %s11 = inlined_call_operand.hbm [shape: f32[2,8,32], index: 11, kind: output, shape index: {}]
  %s12 = sld [smem:[#allocation0]]
  $region113: #{tpu_custom_call.1} parent=0
    _
  %s14 = ssub.s32 1, %s12
  %s15 = scalar_select 0, %s14, %s12
  $region1: #{tpu_custom_call.1} parent=0
    #allocation6 [shape = 'u8[8192]{0}', space=vmem, size = 0x2000, scoped, tag = 'input window, operand 0']
    #allocation7 [shape = 's32[2]{0}', space=sflag, size = 0x8, scoped, tag = 'scoped memory for tpu_custom_call.1']
    #allocation8 [shape = 's32[2]{0}', space=sflag, size = 0x8, scoped, tag = 'scoped memory for tpu_custom_call.1']
    #allocation9 [shape = 'u8[8192]{0}', space=vmem, size = 0x2000, scoped, tag = 'input window, operand 1']
    #allocation10 [shape = 's32[2]{0}', space=sflag, size = 0x8, scoped, tag = 'scoped memory for tpu_custom_call.1']
    #allocation11 [shape = 'u8[8192]{0}', space=vmem, size = 0x2000, scoped, tag = 'input window, operand 2']
    #allocation12 [shape = 'u8[16384]{0}', space=vmem, size = 0x4000, scoped, tag = 'input window, operand 3, single buffered']
    #allocation13 [shape = 's32[1]{0}', space=sflag, size = 0x4, scoped, tag = 'scoped memory for tpu_custom_call.1']
    #allocation14 [shape = 'u8[16384]{0}', space=vmem, size = 0x4000, scoped, tag = 'input window, operand 5, single buffered']
    #allocation15 [shape = 'u8[16384]{0}', space=vmem, size = 0x4000, scoped, tag = 'input window, operand 7, single buffered']
    #allocation16 [shape = 's32[1]{0}', space=sflag, size = 0x4, scoped, tag = 'scoped memory for tpu_custom_call.1']
    #allocation17 [shape = 'u8[16384]{0}', space=vmem, size = 0x4000, scoped, tag = 'input window, operand 9, single buffered']
    #allocation18 [shape = 'u8[8192]{0}', space=vmem, size = 0x2000, scoped, tag = 'output window, operand 0']
    %16 = vsyncpa [#allocation7], 0
    %s17 = scalar_lea.sflag [#allocation7], 1
    %18 = vsyncpa %s17, 0
    %19 = vsyncpa [#allocation10], 0
    %s20 = scalar_lea.sflag [#allocation10], 1
    %21 = vsyncpa %s20, 0
    %22 = vsyncpa [#allocation13], 0
    %23 = vsyncpa [#allocation16], 0
    %24 = vsyncpa [#allocation8], 0
    %s25 = scalar_lea.sflag [#allocation8], 1
    %26 = vsyncpa %s25, 0
    loop: start=0, step=1, limit=4
    $region2: #{tpu_custom_call.1} parent=1 // loop_pre_header
      _
    $region3: #{tpu_custom_call.1} parent=1 // loop_header
      %s28 = sphi 0, %s32
      %p29 = scmp.ge.s32.totalorder %s28, 4
      %s35 = sphi 0, %s54
      %s36 = sphi 0, %s50
      %s37 = sphi 0, %s46
      %s38 = sphi 0, %s35
      %s39 = sphi 0, %s36
      %s40 = sphi 0, %s37
      %s41 = sphi 0, %s38
      %s42 = sphi 0, %s39
      %s43 = sphi 0, %s40
      %s59 = sphi 0, %s61
      %s62 = sphi 0, %s59
      %s63 = sphi 0, %s62
      %s79 = sphi 0, %s63
      %s87 = sphi 0, %s89
      %s90 = sphi 0, %s87
      %s91 = sphi 0, %s90
      %s107 = sphi 0, %s91
      %s115 = sphi 0, %s117
      %s118 = sphi 0, %s115
      %s119 = sphi 0, %s118
      %s135 = sphi 0, %s119
      %s139 = sphi 0, %s139
      %s141 = sphi 0, %s139
      %s142 = sphi 0, %s141
      %s156 = sphi 0, %s142
      %s160 = sphi 0, %s160
      %s162 = sphi 0, %s160
      %s163 = sphi 0, %s162
      %s177 = sphi 0, %s163
      %s181 = sphi 0, %s181
      %s183 = sphi 0, %s181
      %s184 = sphi 0, %s183
      %s198 = sphi 0, %s184
      %s202 = sphi 0, %s202
      %s204 = sphi 0, %s202
      %s205 = sphi 0, %s204
      %s219 = sphi 0, %s205
      %s223 = sphi 0, %s223
      %s225 = sphi 0, %s223
      %s226 = sphi 0, %s225
      %s240 = sphi 0, %s226
      %s244 = sphi 0, %s244
      %s246 = sphi 0, %s244
      %s247 = sphi 0, %s246
      %s261 = sphi 0, %s247
      %s265 = sphi 0, %s265
      %s267 = sphi 0, %s265
      %s268 = sphi 0, %s267
      %s282 = sphi 0, %s268
      %s286 = sphi 0, %s286
      %s288 = sphi 0, %s286
      %s289 = sphi 0, %s288
      %s303 = sphi 0, %s289
      %s311 = sphi 0, %s313
      %s314 = sphi 0, %s311
      %s315 = sphi 0, %s314
      %s331 = sphi 0, %s315
    $region4: #{tpu_custom_call.1} parent=1 // loop_header_branch
      %31 = sbr.rel (%p29) target = $region8
    $region5: #{tpu_custom_call.1} parent=1 // loop_body
      %s33 = ssub.s32 %s28, 1
      %s34 = ssub.s32 %s28, 2
      %s44 = sadd.s32 1, %s37
      %p45 = scmp.ge.s32.totalorder %s44, 1
      %s46 = scalar_select %p45, 0, %s44
      %s47 = sadd.s32 1, %s36
      %s48 = scalar_select %p45, %s47, %s36
      %p49 = scmp.ge.s32.totalorder %s48, 1
      %s50 = scalar_select %p49, 0, %s48
      %s51 = sadd.s32 1, %s35
      %s52 = scalar_select %p49, %s51, %s35
      %p53 = scmp.ge.s32.totalorder %s52, 2
      %s54 = scalar_select %p53, 0, %s52
      %s55 = ssub.s32 %s35, %s54
      %s56 = ssub.s32 %s36, %s50
      %s57 = sor.u32 %s55, %s56
      %p58 = scmp.eq.s32.totalorder %s57, 0
      %s60 = sadd.s32 %s59, 1
      %s61 = scalar_select %p58, %s59, %s60
      %p64 = pneg %p58
      %p65 = scmp.eq.s32.totalorder %s28, 1
      %p66 = por %p64, %p65
      %p67 = scmp.ne.s32.totalorder %s59, %s62
      %p68 = scmp.eq.s32.totalorder %s28, 0
      %p69 = por %p67, %p68
      %p70 = scmp.ne.s32.totalorder %s59, %s62
      %p71 = scmp.eq.s32.totalorder %s33, 1
      %p72 = por %p70, %p71
      %p73 = scmp.ne.s32.totalorder %s62, %s63
      %p74 = scmp.eq.s32.totalorder %s33, 0
      %p75 = por %p73, %p74
      %p76 = scmp.ne.s32.totalorder %s62, %s63
      %p77 = scmp.eq.s32.totalorder %s34, 1
      %p78 = por %p76, %p77
      %p80 = scmp.ne.s32.totalorder %s63, %s79
      %p81 = scmp.eq.s32.totalorder %s34, 0
      %p82 = por %p80, %p81
      %s83 = ssub.s32 %s35, %s54
      %s84 = ssub.s32 %s37, %s46
      %s85 = sor.u32 %s83, %s84
      %p86 = scmp.eq.s32.totalorder %s85, 0
      %s88 = sadd.s32 %s87, 1
      %s89 = scalar_select %p86, %s87, %s88
      %p92 = pneg %p86
      %p93 = scmp.eq.s32.totalorder %s28, 1
      %p94 = por %p92, %p93
      %p95 = scmp.ne.s32.totalorder %s87, %s90
      %p96 = scmp.eq.s32.totalorder %s28, 0
      %p97 = por %p95, %p96
      %p98 = scmp.ne.s32.totalorder %s87, %s90
      %p99 = scmp.eq.s32.totalorder %s33, 1
      %p100 = por %p98, %p99
      %p101 = scmp.ne.s32.totalorder %s90, %s91
      %p102 = scmp.eq.s32.totalorder %s33, 0
      %p103 = por %p101, %p102
      %p104 = scmp.ne.s32.totalorder %s90, %s91
      %p105 = scmp.eq.s32.totalorder %s34, 1
      %p106 = por %p104, %p105
      %p108 = scmp.ne.s32.totalorder %s91, %s107
      %p109 = scmp.eq.s32.totalorder %s34, 0
      %p110 = por %p108, %p109
      %s111 = ssub.s32 %s35, %s54
      %s112 = ssub.s32 %s37, %s46
      %s113 = sor.u32 %s111, %s112
      %p114 = scmp.eq.s32.totalorder %s113, 0
      %s116 = sadd.s32 %s115, 1
      %s117 = scalar_select %p114, %s115, %s116
      %p120 = pneg %p114
      %p121 = scmp.eq.s32.totalorder %s28, 1
      %p122 = por %p120, %p121
      %p123 = scmp.ne.s32.totalorder %s115, %s118
      %p124 = scmp.eq.s32.totalorder %s28, 0
      %p125 = por %p123, %p124
      %p126 = scmp.ne.s32.totalorder %s115, %s118
      %p127 = scmp.eq.s32.totalorder %s33, 1
      %p128 = por %p126, %p127
      %p129 = scmp.ne.s32.totalorder %s118, %s119
      %p130 = scmp.eq.s32.totalorder %s33, 0
      %p131 = por %p129, %p130
      %p132 = scmp.ne.s32.totalorder %s118, %s119
      %p133 = scmp.eq.s32.totalorder %s34, 1
      %p134 = por %p132, %p133
      %p136 = scmp.ne.s32.totalorder %s119, %s135
      %p137 = scmp.eq.s32.totalorder %s34, 0
      %p138 = por %p136, %p137
      %s140 = sadd.s32 %s139, 1
      %p143 = scmp.eq.s32.totalorder %s28, 1
      %p144 = scmp.ne.s32.totalorder %s139, %s141
      %p145 = scmp.eq.s32.totalorder %s28, 0
      %p146 = por %p144, %p145
      %p147 = scmp.ne.s32.totalorder %s139, %s141
      %p148 = scmp.eq.s32.totalorder %s33, 1
      %p149 = por %p147, %p148
      %p150 = scmp.ne.s32.totalorder %s141, %s142
      %p151 = scmp.eq.s32.totalorder %s33, 0
      %p152 = por %p150, %p151
      %p153 = scmp.ne.s32.totalorder %s141, %s142
      %p154 = scmp.eq.s32.totalorder %s34, 1
      %p155 = por %p153, %p154
      %p157 = scmp.ne.s32.totalorder %s142, %s156
      %p158 = scmp.eq.s32.totalorder %s34, 0
      %p159 = por %p157, %p158
      %s161 = sadd.s32 %s160, 1
      %p164 = scmp.eq.s32.totalorder %s28, 1
      %p165 = scmp.ne.s32.totalorder %s160, %s162
      %p166 = scmp.eq.s32.totalorder %s28, 0
      %p167 = por %p165, %p166
      %p168 = scmp.ne.s32.totalorder %s160, %s162
      %p169 = scmp.eq.s32.totalorder %s33, 1
      %p170 = por %p168, %p169
      %p171 = scmp.ne.s32.totalorder %s162, %s163
      %p172 = scmp.eq.s32.totalorder %s33, 0
      %p173 = por %p171, %p172
      %p174 = scmp.ne.s32.totalorder %s162, %s163
      %p175 = scmp.eq.s32.totalorder %s34, 1
      %p176 = por %p174, %p175
      %p178 = scmp.ne.s32.totalorder %s163, %s177
      %p179 = scmp.eq.s32.totalorder %s34, 0
      %p180 = por %p178, %p179
      %s182 = sadd.s32 %s181, 1
      %p185 = scmp.eq.s32.totalorder %s28, 1
      %p186 = scmp.ne.s32.totalorder %s181, %s183
      %p187 = scmp.eq.s32.totalorder %s28, 0
      %p188 = por %p186, %p187
      %p189 = scmp.ne.s32.totalorder %s181, %s183
      %p190 = scmp.eq.s32.totalorder %s33, 1
      %p191 = por %p189, %p190
      %p192 = scmp.ne.s32.totalorder %s183, %s184
      %p193 = scmp.eq.s32.totalorder %s33, 0
      %p194 = por %p192, %p193
      %p195 = scmp.ne.s32.totalorder %s183, %s184
      %p196 = scmp.eq.s32.totalorder %s34, 1
      %p197 = por %p195, %p196
      %p199 = scmp.ne.s32.totalorder %s184, %s198
      %p200 = scmp.eq.s32.totalorder %s34, 0
      %p201 = por %p199, %p200
      %s203 = sadd.s32 %s202, 1
      %p206 = scmp.eq.s32.totalorder %s28, 1
      %p207 = scmp.ne.s32.totalorder %s202, %s204
      %p208 = scmp.eq.s32.totalorder %s28, 0
      %p209 = por %p207, %p208
      %p210 = scmp.ne.s32.totalorder %s202, %s204
      %p211 = scmp.eq.s32.totalorder %s33, 1
      %p212 = por %p210, %p211
      %p213 = scmp.ne.s32.totalorder %s204, %s205
      %p214 = scmp.eq.s32.totalorder %s33, 0
      %p215 = por %p213, %p214
      %p216 = scmp.ne.s32.totalorder %s204, %s205
      %p217 = scmp.eq.s32.totalorder %s34, 1
      %p218 = por %p216, %p217
      %p220 = scmp.ne.s32.totalorder %s205, %s219
      %p221 = scmp.eq.s32.totalorder %s34, 0
      %p222 = por %p220, %p221
      %s224 = sadd.s32 %s223, 1
      %p227 = scmp.eq.s32.totalorder %s28, 1
      %p228 = scmp.ne.s32.totalorder %s223, %s225
      %p229 = scmp.eq.s32.totalorder %s28, 0
      %p230 = por %p228, %p229
      %p231 = scmp.ne.s32.totalorder %s223, %s225
      %p232 = scmp.eq.s32.totalorder %s33, 1
      %p233 = por %p231, %p232
      %p234 = scmp.ne.s32.totalorder %s225, %s226
      %p235 = scmp.eq.s32.totalorder %s33, 0
      %p236 = por %p234, %p235
      %p237 = scmp.ne.s32.totalorder %s225, %s226
      %p238 = scmp.eq.s32.totalorder %s34, 1
      %p239 = por %p237, %p238
      %p241 = scmp.ne.s32.totalorder %s226, %s240
      %p242 = scmp.eq.s32.totalorder %s34, 0
      %p243 = por %p241, %p242
      %s245 = sadd.s32 %s244, 1
      %p248 = scmp.eq.s32.totalorder %s28, 1
      %p249 = scmp.ne.s32.totalorder %s244, %s246
      %p250 = scmp.eq.s32.totalorder %s28, 0
      %p251 = por %p249, %p250
      %p252 = scmp.ne.s32.totalorder %s244, %s246
      %p253 = scmp.eq.s32.totalorder %s33, 1
      %p254 = por %p252, %p253
      %p255 = scmp.ne.s32.totalorder %s246, %s247
      %p256 = scmp.eq.s32.totalorder %s33, 0
      %p257 = por %p255, %p256
      %p258 = scmp.ne.s32.totalorder %s246, %s247
      %p259 = scmp.eq.s32.totalorder %s34, 1
      %p260 = por %p258, %p259
      %p262 = scmp.ne.s32.totalorder %s247, %s261
      %p263 = scmp.eq.s32.totalorder %s34, 0
      %p264 = por %p262, %p263
      %s266 = sadd.s32 %s265, 1
      %p269 = scmp.eq.s32.totalorder %s28, 1
      %p270 = scmp.ne.s32.totalorder %s265, %s267
      %p271 = scmp.eq.s32.totalorder %s28, 0
      %p272 = por %p270, %p271
      %p273 = scmp.ne.s32.totalorder %s265, %s267
      %p274 = scmp.eq.s32.totalorder %s33, 1
      %p275 = por %p273, %p274
      %p276 = scmp.ne.s32.totalorder %s267, %s268
      %p277 = scmp.eq.s32.totalorder %s33, 0
      %p278 = por %p276, %p277
      %p279 = scmp.ne.s32.totalorder %s267, %s268
      %p280 = scmp.eq.s32.totalorder %s34, 1
      %p281 = por %p279, %p280
      %p283 = scmp.ne.s32.totalorder %s268, %s282
      %p284 = scmp.eq.s32.totalorder %s34, 0
      %p285 = por %p283, %p284
      %s287 = sadd.s32 %s286, 1
      %p290 = scmp.eq.s32.totalorder %s28, 1
      %p291 = scmp.ne.s32.totalorder %s286, %s288
      %p292 = scmp.eq.s32.totalorder %s28, 0
      %p293 = por %p291, %p292
      %p294 = scmp.ne.s32.totalorder %s286, %s288
      %p295 = scmp.eq.s32.totalorder %s33, 1
      %p296 = por %p294, %p295
      %p297 = scmp.ne.s32.totalorder %s288, %s289
      %p298 = scmp.eq.s32.totalorder %s33, 0
      %p299 = por %p297, %p298
      %p300 = scmp.ne.s32.totalorder %s288, %s289
      %p301 = scmp.eq.s32.totalorder %s34, 1
      %p302 = por %p300, %p301
      %p304 = scmp.ne.s32.totalorder %s289, %s303
      %p305 = scmp.eq.s32.totalorder %s34, 0
      %p306 = por %p304, %p305
      %s307 = ssub.s32 %s35, %s54
      %s308 = ssub.s32 %s36, %s50
      %s309 = sor.u32 %s307, %s308
      %p310 = scmp.eq.s32.totalorder %s309, 0
      %s312 = sadd.s32 %s311, 1
      %s313 = scalar_select %p310, %s311, %s312
      %p316 = pneg %p310
      %p317 = scmp.eq.s32.totalorder %s28, 1
      %p318 = por %p316, %p317
      %p319 = scmp.ne.s32.totalorder %s311, %s314
      %p320 = scmp.eq.s32.totalorder %s28, 0
      %p321 = por %p319, %p320
      %p322 = scmp.ne.s32.totalorder %s311, %s314
      %p323 = scmp.eq.s32.totalorder %s33, 1
      %p324 = por %p322, %p323
      %p325 = scmp.ne.s32.totalorder %s314, %s315
      %p326 = scmp.eq.s32.totalorder %s33, 0
      %p327 = por %p325, %p326
      %p328 = scmp.ne.s32.totalorder %s314, %s315
      %p329 = scmp.eq.s32.totalorder %s34, 1
      %p330 = por %p328, %p329
      %p332 = scmp.ne.s32.totalorder %s315, %s331
      %p333 = scmp.eq.s32.totalorder %s34, 0
      %p334 = por %p332, %p333
      %p335 = scmp.le.s32.totalorder 1, %s28
      %p336 = scmp.lt.s32.totalorder %s28, 3
      %p337 = pnand %p335, %p336
      %p338 = pneg %p337
      // Predicated region
      $region9: #{tpu_custom_call.1} parent=5 // pred_check
        _
      $region10: #{tpu_custom_call.1} parent=5 // pred_check_branch
        %340 = sbr.rel (%p337) target = $region12
      $region11: #{tpu_custom_call.1} parent=5 // pred_region
        %s341 = ssub.s32 %s28, 1
        // Predicated region
        $region13: #{tpu_custom_call.1} parent=11 // pred_check
          %p342 = pneg %p152
        $region14: #{tpu_custom_call.1} parent=11 // pred_check_branch
          %344 = sbr.rel (%p342) target = $region16
        $region15: #{tpu_custom_call.1} parent=11 // pred_region
          %s346 = ssub.s32 512, 512
          %347 = vsyncadd [#allocation13], %s346
          %s348 = sshll.u32 [#allocation12], 4
          %s349 = int_to_ptr.vmem [resolvable:$true] %s348
          %354 = dma.hbm_to_vmem [thread:$0]  %s3, 512, %s349, [#allocation13], 128, 128, 8
        $region16: #{tpu_custom_call.1} parent=11 // pred_fallthru
          _
        // Predicated region
        $region17: #{tpu_custom_call.1} parent=11 // pred_check
          %p355 = pneg %p173
        $region18: #{tpu_custom_call.1} parent=11 // pred_check_branch
          %357 = sbr.rel (%p355) target = $region20
        $region19: #{tpu_custom_call.1} parent=11 // pred_region
          _
        $region20: #{tpu_custom_call.1} parent=11 // pred_fallthru
          _
        // Predicated region
        $region21: #{tpu_custom_call.1} parent=11 // pred_check
          %p358 = pneg %p194
        $region22: #{tpu_custom_call.1} parent=11 // pred_check_branch
          %360 = sbr.rel (%p358) target = $region24
        $region23: #{tpu_custom_call.1} parent=11 // pred_region
          %s362 = ssub.s32 512, 512
          %363 = vsyncadd [#allocation13], %s362
          %s364 = sshll.u32 [#allocation14], 4
          %s365 = int_to_ptr.vmem [resolvable:$true] %s364
          %370 = dma.hbm_to_vmem [thread:$0]  %s5, 512, %s365, [#allocation13], 128, 128, 8
        $region24: #{tpu_custom_call.1} parent=11 // pred_fallthru
          _
        // Predicated region
        $region25: #{tpu_custom_call.1} parent=11 // pred_check
          %p371 = pneg %p215
        $region26: #{tpu_custom_call.1} parent=11 // pred_check_branch
          %373 = sbr.rel (%p371) target = $region28
        $region27: #{tpu_custom_call.1} parent=11 // pred_region
          _
        $region28: #{tpu_custom_call.1} parent=11 // pred_fallthru
          _
        // Predicated region
        $region29: #{tpu_custom_call.1} parent=11 // pred_check
          %p374 = pneg %p236
        $region30: #{tpu_custom_call.1} parent=11 // pred_check_branch
          %376 = sbr.rel (%p374) target = $region32
        $region31: #{tpu_custom_call.1} parent=11 // pred_region
          %s378 = ssub.s32 512, 512
          %379 = vsyncadd [#allocation16], %s378
          %s380 = sshll.u32 [#allocation15], 4
          %s381 = int_to_ptr.vmem [resolvable:$true] %s380
          %386 = dma.hbm_to_vmem [thread:$0]  %s7, 512, %s381, [#allocation16], 128, 128, 8
        $region32: #{tpu_custom_call.1} parent=11 // pred_fallthru
          _
        // Predicated region
        $region33: #{tpu_custom_call.1} parent=11 // pred_check
          %p387 = pneg %p257
        $region34: #{tpu_custom_call.1} parent=11 // pred_check_branch
          %389 = sbr.rel (%p387) target = $region36
        $region35: #{tpu_custom_call.1} parent=11 // pred_region
          _
        $region36: #{tpu_custom_call.1} parent=11 // pred_fallthru
          _
        // Predicated region
        $region37: #{tpu_custom_call.1} parent=11 // pred_check
          %p390 = pneg %p278
        $region38: #{tpu_custom_call.1} parent=11 // pred_check_branch
          %392 = sbr.rel (%p390) target = $region40
        $region39: #{tpu_custom_call.1} parent=11 // pred_region
          %s394 = ssub.s32 512, 512
          %395 = vsyncadd [#allocation16], %s394
          %s396 = sshll.u32 [#allocation17], 4
          %s397 = int_to_ptr.vmem [resolvable:$true] %s396
          %402 = dma.hbm_to_vmem [thread:$0]  %s9, 512, %s397, [#allocation16], 128, 128, 8
        $region40: #{tpu_custom_call.1} parent=11 // pred_fallthru
          _
        // Predicated region
        $region41: #{tpu_custom_call.1} parent=11 // pred_check
          %p403 = pneg %p299
        $region42: #{tpu_custom_call.1} parent=11 // pred_check_branch
          %405 = sbr.rel (%p403) target = $region44
        $region43: #{tpu_custom_call.1} parent=11 // pred_region
          _
        $region44: #{tpu_custom_call.1} parent=11 // pred_fallthru
          _
      $region12: #{tpu_custom_call.1} parent=5 // pred_fallthru
        _
      %p406 = scmp.lt.s32.totalorder %s28, 2
      // Predicated region
      $region45: #{tpu_custom_call.1} parent=5 // pred_check
        %p407 = pneg %p406
      $region46: #{tpu_custom_call.1} parent=5 // pred_check_branch
        %409 = sbr.rel (%p407) target = $region48
      $region47: #{tpu_custom_call.1} parent=5 // pred_region
        // Predicated region
        $region49: #{tpu_custom_call.1} parent=47 // pred_check
          %p410 = pneg %p69
        $region50: #{tpu_custom_call.1} parent=47 // pred_check_branch
          %412 = sbr.rel (%p410) target = $region52
        $region51: #{tpu_custom_call.1} parent=47 // pred_region
          %s413 = sand.u32 %s59, 1
          %s414 = scalar_lea.sflag [#allocation7], %s413
          %s415 = sand.u32 %s59, 1
          %s416 = smul.addr %s415, 8
          %s417 = scalar_lea.vmem [#allocation6], %s416
          %s419 = ssub.s32 128, 128
          %420 = vsyncadd %s414, %s419
          %s421 = sadd.s32 %s36, %s35
          %s422 = smul.addr %s421, 128
          %s423 = scalar_lea.hbm %s0, %s422
          %s425 = sshll.u32 %s417, 4
          %s426 = int_to_ptr.vmem [resolvable:$true] %s425
          %428 = dma.hbm_to_vmem [thread:$0]  %s423, 128, %s426, %s414
        $region52: #{tpu_custom_call.1} parent=47 // pred_fallthru
          _
        // Predicated region
        $region53: #{tpu_custom_call.1} parent=47 // pred_check
          %p429 = pneg %p97
        $region54: #{tpu_custom_call.1} parent=47 // pred_check_branch
          %431 = sbr.rel (%p429) target = $region56
        $region55: #{tpu_custom_call.1} parent=47 // pred_region
          %s432 = sand.u32 %s28, 1
          %s433 = scalar_lea.sflag [#allocation10], %s432
          %s434 = sand.u32 %s87, 1
          %s435 = smul.addr %s434, 8
          %s436 = scalar_lea.vmem [#allocation9], %s435
          %s438 = ssub.s32 128, 128
          %439 = vsyncadd %s433, %s438
          %s440 = sadd.s32 %s37, %s35
          %s441 = smul.addr %s440, 128
          %s442 = scalar_lea.hbm %s1, %s441
          %s444 = sshll.u32 %s436, 4
          %s445 = int_to_ptr.vmem [resolvable:$true] %s444
          %447 = dma.hbm_to_vmem [thread:$0]  %s442, 128, %s445, %s433
        $region56: #{tpu_custom_call.1} parent=47 // pred_fallthru
          _
        // Predicated region
        $region57: #{tpu_custom_call.1} parent=47 // pred_check
          %p448 = pneg %p125
        $region58: #{tpu_custom_call.1} parent=47 // pred_check_branch
          %450 = sbr.rel (%p448) target = $region60
        $region59: #{tpu_custom_call.1} parent=47 // pred_region
          %s451 = sand.u32 %s28, 1
          %s452 = scalar_lea.sflag [#allocation10], %s451
          %s453 = sand.u32 %s115, 1
          %s454 = smul.addr %s453, 8
          %s455 = scalar_lea.vmem [#allocation11], %s454
          %s457 = ssub.s32 128, 128
          %458 = vsyncadd %s452, %s457
          %s459 = sadd.s32 %s37, %s35
          %s460 = smul.addr %s459, 128
          %s461 = scalar_lea.hbm %s2, %s460
          %s463 = sshll.u32 %s455, 4
          %s464 = int_to_ptr.vmem [resolvable:$true] %s463
          %466 = dma.hbm_to_vmem [thread:$0]  %s461, 128, %s464, %s452
        $region60: #{tpu_custom_call.1} parent=47 // pred_fallthru
          _
      $region48: #{tpu_custom_call.1} parent=5 // pred_fallthru
        _
      %p467 = scmp.le.s32.totalorder 1, %s28
      %p468 = scmp.lt.s32.totalorder %s28, 3
      %p469 = pnand %p467, %p468
      %p470 = pneg %p469
      // Predicated region
      $region61: #{tpu_custom_call.1} parent=5 // pred_check
        _
      $region62: #{tpu_custom_call.1} parent=5 // pred_check_branch
        %472 = sbr.rel (%p469) target = $region64
      $region63: #{tpu_custom_call.1} parent=5 // pred_region
        %s473 = ssub.s32 %s28, 1
        %s474 = sand.u32 %s62, 1
        %s475 = scalar_lea.sflag [#allocation7], %s474
        %s476 = sand.u32 %s62, 1
        %s477 = smul.addr %s476, 8
        %s478 = scalar_lea.vmem [#allocation6], %s477
        // Predicated region
        $region65: #{tpu_custom_call.1} parent=63 // pred_check
          %p479 = pneg %p75
        $region66: #{tpu_custom_call.1} parent=63 // pred_check_branch
          %481 = sbr.rel (%p479) target = $region68
        $region67: #{tpu_custom_call.1} parent=63 // pred_region
          %482 = dma.done %s475, 128
        $region68: #{tpu_custom_call.1} parent=63 // pred_fallthru
          _
        %s483 = sand.u32 %s33, 1
        %s484 = scalar_lea.sflag [#allocation10], %s483
        %s485 = sand.u32 %s90, 1
        %s486 = smul.addr %s485, 8
        %s487 = scalar_lea.vmem [#allocation9], %s486
        // Predicated region
        $region69: #{tpu_custom_call.1} parent=63 // pred_check
          %p488 = pneg %p103
        $region70: #{tpu_custom_call.1} parent=63 // pred_check_branch
          %490 = sbr.rel (%p488) target = $region72
        $region71: #{tpu_custom_call.1} parent=63 // pred_region
          %491 = dma.done %s484, 128
        $region72: #{tpu_custom_call.1} parent=63 // pred_fallthru
          _
        %s492 = sand.u32 %s33, 1
        %s493 = scalar_lea.sflag [#allocation10], %s492
        %s494 = sand.u32 %s118, 1
        %s495 = smul.addr %s494, 8
        %s496 = scalar_lea.vmem [#allocation11], %s495
        // Predicated region
        $region73: #{tpu_custom_call.1} parent=63 // pred_check
          %p497 = pneg %p131
        $region74: #{tpu_custom_call.1} parent=63 // pred_check_branch
          %499 = sbr.rel (%p497) target = $region76
        $region75: #{tpu_custom_call.1} parent=63 // pred_region
          %500 = dma.done %s493, 128
        $region76: #{tpu_custom_call.1} parent=63 // pred_fallthru
          _
        // Predicated region
        $region77: #{tpu_custom_call.1} parent=63 // pred_check
          %p501 = pneg %p152
        $region78: #{tpu_custom_call.1} parent=63 // pred_check_branch
          %503 = sbr.rel (%p501) target = $region80
        $region79: #{tpu_custom_call.1} parent=63 // pred_region
          %504 = dma.done [#allocation13], 512
        $region80: #{tpu_custom_call.1} parent=63 // pred_fallthru
          _
        // Predicated region
        $region81: #{tpu_custom_call.1} parent=63 // pred_check
          %p505 = pneg %p194
        $region82: #{tpu_custom_call.1} parent=63 // pred_check_branch
          %507 = sbr.rel (%p505) target = $region84
        $region83: #{tpu_custom_call.1} parent=63 // pred_region
          %508 = dma.done [#allocation13], 512
        $region84: #{tpu_custom_call.1} parent=63 // pred_fallthru
          _
        // Predicated region
        $region85: #{tpu_custom_call.1} parent=63 // pred_check
          %p509 = pneg %p236
        $region86: #{tpu_custom_call.1} parent=63 // pred_check_branch
          %511 = sbr.rel (%p509) target = $region88
        $region87: #{tpu_custom_call.1} parent=63 // pred_region
          %512 = dma.done [#allocation16], 512
        $region88: #{tpu_custom_call.1} parent=63 // pred_fallthru
          _
        // Predicated region
        $region89: #{tpu_custom_call.1} parent=63 // pred_check
          %p513 = pneg %p278
        $region90: #{tpu_custom_call.1} parent=63 // pred_check_branch
          %515 = sbr.rel (%p513) target = $region92
        $region91: #{tpu_custom_call.1} parent=63 // pred_region
          %516 = dma.done [#allocation16], 512
        $region92: #{tpu_custom_call.1} parent=63 // pred_fallthru
          _
        %s517 = sand.u32 %s62, 1
        %s518 = scalar_lea.sflag [#allocation7], %s517
        %s519 = sand.u32 %s62, 1
        %s520 = smul.addr %s519, 8
        %s521 = scalar_lea.vmem [#allocation6], %s520
        %p522 = pneg %p75
        %p523 = pneg %p72
        %s524 = sand.u32 %s33, 1
        %s525 = scalar_lea.sflag [#allocation10], %s524
        %s526 = sand.u32 %s90, 1
        %s527 = smul.addr %s526, 8
        %s528 = scalar_lea.vmem [#allocation9], %s527
        %p529 = pneg %p103
        %p530 = pneg %p100
        %s531 = sand.u32 %s33, 1
        %s532 = scalar_lea.sflag [#allocation10], %s531
        %s533 = sand.u32 %s118, 1
        %s534 = smul.addr %s533, 8
        %s535 = scalar_lea.vmem [#allocation11], %s534
        %p536 = pneg %p131
        %p537 = pneg %p128
        %p538 = pneg %p152
        %p539 = pneg %p149
        %p540 = pneg %p173
        %p541 = pneg %p170
        %p542 = pneg %p194
        %p543 = pneg %p191
        %p544 = pneg %p215
        %p545 = pneg %p212
        %p546 = pneg %p236
        %p547 = pneg %p233
        %p548 = pneg %p257
        %p549 = pneg %p254
        %p550 = pneg %p278
        %p551 = pneg %p275
        %p552 = pneg %p299
        %p553 = pneg %p296
        %p554 = pneg %p327
        %p555 = pneg %p324
        %s556 = sand.u32 %s314, 1
        %s557 = scalar_lea.sflag [#allocation8], %s556
        %s558 = sand.u32 %s314, 1
        %s559 = smul.addr %s558, 8
        %s560 = scalar_lea.vmem [#allocation18], %s559
        %p561 = scmp.eq.s32.totalorder %s40, 0
        // Predicated region
        $region93: #{tpu_custom_call.1} parent=63 // pred_check
          %p562 = pneg %p561
        $region94: #{tpu_custom_call.1} parent=63 // pred_check_branch
          %564 = sbr.rel (%p562) target = $region96
        $region95: #{tpu_custom_call.1} parent=63 // pred_region
          %v565 = vld [vmem:[%s478] sm:$0xff]
          %v566 = vld [vmem:[#allocation12] sm:$0xff]
          %v567 = vld [vmem:[#allocation12 + $0x8] sm:$0xff]
          %v568 = vld [vmem:[#allocation12 + $0x10] sm:$0xff]
          %v569 = vld [vmem:[#allocation12 + $0x18] sm:$0xff]
          %v570 = vld [vmem:[%s4] sm:$0x1]
          %v572 = vlaneseq
          %v573 = vshrl.u32 %v572, 7
          %v574 = vsub.s32 0, %v573
          %v575 = vrot.slane %v570, %v574
          %vm577 = vcmask 261120
          %v579 = vsel %vm577, %v565, 0
          %581 = vmatprep.subr.mxu0 0.0
          %582 = vmatpush1.msra.mxu0 0.0
          %583 = vmatprep.subr.mxu0 0.0
          %584 = vmatpush1.msra.mxu0 0.0
          %585 = vmatprep.subr.mxu0 0.0
          %586 = vmatpush1.msra.mxu0 0.0
          %587 = vmatprep.subr.mxu0 0.0
          %588 = vmatpush1.msra.mxu0 0.0
          %589 = vmatprep.subr.mxu0 0.0
          %590 = vmatpush1.msra.mxu0 0.0
          %591 = vmatprep.subr.mxu0 0.0
          %592 = vmatpush1.msra.mxu0 0.0
          %593 = vmatprep.subr.mxu0 0.0
          %594 = vmatpush1.msra.mxu0 0.0
          %595 = vmatprep.subr.mxu0 0.0
          %596 = vmatpush1.msra.mxu0 0.0
          %597 = vmatprep.subr.mxu0 0.0
          %598 = vmatpush1.msra.mxu0 0.0
          %599 = vmatprep.subr.mxu0 0.0
          %600 = vmatpush1.msra.mxu0 0.0
          %601 = vmatprep.subr.mxu0 0.0
          %602 = vmatpush1.msra.mxu0 0.0
          %603 = vmatprep.subr.mxu0 0.0
          %604 = vmatpush1.msra.mxu0 0.0
          %605 = vmatprep.subr.mxu0 0.0
          %606 = vmatpush1.msra.mxu0 %v569
          %607 = vmatprep.subr.mxu0 0.0
          %608 = vmatpush1.msra.mxu0 %v568
          %609 = vmatprep.subr.mxu0 0.0
          %610 = vmatpush1.msra.mxu0 %v567
          %611 = vmatprep.subr.mxu0 0.0
          %612 = vmatpush1.msra.mxu0 %v566
          %613 = vmatprep.subr.mxu0 0.0
          %614 = vmatpush2.msra.mxu0 0.0
          %615 = vmatprep.subr.mxu0 0.0
          %616 = vmatpush2.msra.mxu0 0.0
          %617 = vmatprep.subr.mxu0 0.0
          %618 = vmatpush2.msra.mxu0 0.0
          %619 = vmatprep.subr.mxu0 0.0
          %620 = vmatpush2.msra.mxu0 0.0
          %621 = vmatprep.subr.mxu0 0.0
          %622 = vmatpush2.msra.mxu0 0.0
          %623 = vmatprep.subr.mxu0 0.0
          %624 = vmatpush2.msra.mxu0 0.0
          %625 = vmatprep.subr.mxu0 0.0
          %626 = vmatpush2.msra.mxu0 0.0
          %627 = vmatprep.subr.mxu0 0.0
          %628 = vmatpush2.msra.mxu0 0.0
          %629 = vmatprep.subr.mxu0 0.0
          %630 = vmatpush2.msra.mxu0 0.0
          %631 = vmatprep.subr.mxu0 0.0
          %632 = vmatpush2.msra.mxu0 0.0
          %633 = vmatprep.subr.mxu0 0.0
          %634 = vmatpush2.msra.mxu0 0.0
          %635 = vmatprep.subr.mxu0 0.0
          %636 = vmatpush2.msra.mxu0 0.0
          %637 = vmatprep.subr.mxu0 0.0
          %638 = vmatpush2.msra.mxu0 0.0
          %639 = vmatprep.subr.mxu0 0.0
          %640 = vmatpush2.msra.mxu0 0.0
          %641 = vmatprep.subr.mxu0 0.0
          %642 = vmatpush2.msra.mxu0 0.0
          %643 = vmatprep.subr.mxu0 0.0
          %644 = vmatpush2.msra.mxu0 0.0
          %645 = vmatprep.mubr.f32.mxu0 0.0
          %646 = vmatmul.mubr.f32.gmra.mxu0 %v579
          %v647 = vpop.f32.mrf.mxu0
          %v648 = vadd.f32 %v575, %v647
          %v649 = vpop.f32.mrf.mxu0
          %650 = vdwg.mxu0
          %v651 = vmul.f32 %v648, 0.35355338
          %653 = vrot.lane.b32.xlu0 %v651, 120
          %v654 = vpop.permute.xlu0 %653
          %656 = vrot.lane.b32.xlu0 %v651, 112
          %v657 = vpop.permute.xlu0 %656
          %659 = vrot.lane.b32.xlu0 %v651, 104
          %v660 = vpop.permute.xlu0 %659
          %vm662 = vcmask 64512
          %663 = vst.msk [vmem:[#allocation2] sm:$0xff] %vm662, %v651
          %664 = vst.msk [vmem:[#allocation2 + $0x8] sm:$0xff] %vm662, %v654
          %665 = vst.msk [vmem:[#allocation2 + $0x10] sm:$0xff] %vm662, %v657
          %666 = vst.msk [vmem:[#allocation2 + $0x18] sm:$0xff] %vm662, %v660
          %vm667 = vcmask 7168
          %668 = vst.msk [vmem:[#allocation3] sm:$0xff] %vm667, -inf
          %669 = vst.msk [vmem:[#allocation3 + $0x8] sm:$0xff] %vm667, -inf
          %670 = vst.msk [vmem:[#allocation3 + $0x10] sm:$0xff] %vm667, -inf
          %671 = vst.msk [vmem:[#allocation3 + $0x18] sm:$0xff] %vm667, -inf
          %672 = vst.msk [vmem:[#allocation4] sm:$0xff] %vm667, 0.0
          %673 = vst.msk [vmem:[#allocation4 + $0x8] sm:$0xff] %vm667, 0.0
          %674 = vst.msk [vmem:[#allocation4 + $0x10] sm:$0xff] %vm667, 0.0
          %675 = vst.msk [vmem:[#allocation4 + $0x18] sm:$0xff] %vm667, 0.0
          %676 = vst.msk [vmem:[#allocation5] sm:$0xff] %vm662, 0.0
          %677 = vst.msk [vmem:[#allocation5 + $0x8] sm:$0xff] %vm662, 0.0
          %678 = vst.msk [vmem:[#allocation5 + $0x10] sm:$0xff] %vm662, 0.0
          %679 = vst.msk [vmem:[#allocation5 + $0x18] sm:$0xff] %vm662, 0.0
        $region96: #{tpu_custom_call.1} parent=63 // pred_fallthru
          _
        %v680 = vld [vmem:[%s487] sm:$0xff]
        %v681 = vld [vmem:[#allocation14] sm:$0xff]
        %v682 = vld [vmem:[#allocation14 + $0x8] sm:$0xff]
        %v683 = vld [vmem:[#allocation14 + $0x10] sm:$0xff]
        %v684 = vld [vmem:[#allocation14 + $0x18] sm:$0xff]
        %v685 = vld [vmem:[%s6] sm:$0x1]
        %v687 = vlaneseq
        %v688 = vshrl.u32 %v687, 7
        %v689 = vsub.s32 0, %v688
        %v690 = vrot.slane %v685, %v689
        %vm692 = vcmask 261120
        %v694 = vsel %vm692, %v680, 0
        %696 = vmatprep.subr.mxu0 0.0
        %697 = vmatpush1.msra.mxu0 0.0
        %698 = vmatprep.subr.mxu0 0.0
        %699 = vmatpush1.msra.mxu0 0.0
        %700 = vmatprep.subr.mxu0 0.0
        %701 = vmatpush1.msra.mxu0 0.0
        %702 = vmatprep.subr.mxu0 0.0
        %703 = vmatpush1.msra.mxu0 0.0
        %704 = vmatprep.subr.mxu0 0.0
        %705 = vmatpush1.msra.mxu0 0.0
        %706 = vmatprep.subr.mxu0 0.0
        %707 = vmatpush1.msra.mxu0 0.0
        %708 = vmatprep.subr.mxu0 0.0
        %709 = vmatpush1.msra.mxu0 0.0
        %710 = vmatprep.subr.mxu0 0.0
        %711 = vmatpush1.msra.mxu0 0.0
        %712 = vmatprep.subr.mxu0 0.0
        %713 = vmatpush1.msra.mxu0 0.0
        %714 = vmatprep.subr.mxu0 0.0
        %715 = vmatpush1.msra.mxu0 0.0
        %716 = vmatprep.subr.mxu0 0.0
        %717 = vmatpush1.msra.mxu0 0.0
        %718 = vmatprep.subr.mxu0 0.0
        %719 = vmatpush1.msra.mxu0 0.0
        %720 = vmatprep.subr.mxu0 0.0
        %721 = vmatpush1.msra.mxu0 %v684
        %722 = vmatprep.subr.mxu0 0.0
        %723 = vmatpush1.msra.mxu0 %v683
        %724 = vmatprep.subr.mxu0 0.0
        %725 = vmatpush1.msra.mxu0 %v682
        %726 = vmatprep.subr.mxu0 0.0
        %727 = vmatpush1.msra.mxu0 %v681
        %728 = vmatprep.subr.mxu0 0.0
        %729 = vmatpush2.msra.mxu0 0.0
        %730 = vmatprep.subr.mxu0 0.0
        %731 = vmatpush2.msra.mxu0 0.0
        %732 = vmatprep.subr.mxu0 0.0
        %733 = vmatpush2.msra.mxu0 0.0
        %734 = vmatprep.subr.mxu0 0.0
        %735 = vmatpush2.msra.mxu0 0.0
        %736 = vmatprep.subr.mxu0 0.0
        %737 = vmatpush2.msra.mxu0 0.0
        %738 = vmatprep.subr.mxu0 0.0
        %739 = vmatpush2.msra.mxu0 0.0
        %740 = vmatprep.subr.mxu0 0.0
        %741 = vmatpush2.msra.mxu0 0.0
        %742 = vmatprep.subr.mxu0 0.0
        %743 = vmatpush2.msra.mxu0 0.0
        %744 = vmatprep.subr.mxu0 0.0
        %745 = vmatpush2.msra.mxu0 0.0
        %746 = vmatprep.subr.mxu0 0.0
        %747 = vmatpush2.msra.mxu0 0.0
        %748 = vmatprep.subr.mxu0 0.0
        %749 = vmatpush2.msra.mxu0 0.0
        %750 = vmatprep.subr.mxu0 0.0
        %751 = vmatpush2.msra.mxu0 0.0
        %752 = vmatprep.subr.mxu0 0.0
        %753 = vmatpush2.msra.mxu0 0.0
        %754 = vmatprep.subr.mxu0 0.0
        %755 = vmatpush2.msra.mxu0 0.0
        %756 = vmatprep.subr.mxu0 0.0
        %757 = vmatpush2.msra.mxu0 0.0
        %758 = vmatprep.subr.mxu0 0.0
        %759 = vmatpush2.msra.mxu0 0.0
        %760 = vmatprep.mubr.f32.mxu0 0.0
        %761 = vmatmul.mubr.f32.gmra.mxu0 %v694
        %v762 = vpop.f32.mrf.mxu0
        %v763 = vadd.f32 %v690, %v762
        %v764 = vpop.f32.mrf.mxu0
        %765 = vdwg.mxu0
        %v766 = vld [vmem:[%s496] sm:$0xff]
        %v767 = vld [vmem:[#allocation15] sm:$0xff]
        %v768 = vld [vmem:[#allocation15 + $0x8] sm:$0xff]
        %v769 = vld [vmem:[#allocation15 + $0x10] sm:$0xff]
        %v770 = vld [vmem:[#allocation15 + $0x18] sm:$0xff]
        %v771 = vld [vmem:[%s8] sm:$0x1]
        %v773 = vlaneseq
        %v774 = vshrl.u32 %v773, 7
        %v775 = vsub.s32 0, %v774
        %v776 = vrot.slane %v771, %v775
        %v779 = vsel %vm692, %v766, 0
        %781 = vmatprep.subr.mxu0 0.0
        %782 = vmatpush1.msra.mxu0 0.0
        %783 = vmatprep.subr.mxu0 0.0
        %784 = vmatpush1.msra.mxu0 0.0
        %785 = vmatprep.subr.mxu0 0.0
        %786 = vmatpush1.msra.mxu0 0.0
        %787 = vmatprep.subr.mxu0 0.0
        %788 = vmatpush1.msra.mxu0 0.0
        %789 = vmatprep.subr.mxu0 0.0
        %790 = vmatpush1.msra.mxu0 0.0
        %791 = vmatprep.subr.mxu0 0.0
        %792 = vmatpush1.msra.mxu0 0.0
        %793 = vmatprep.subr.mxu0 0.0
        %794 = vmatpush1.msra.mxu0 0.0
        %795 = vmatprep.subr.mxu0 0.0
        %796 = vmatpush1.msra.mxu0 0.0
        %797 = vmatprep.subr.mxu0 0.0
        %798 = vmatpush1.msra.mxu0 0.0
        %799 = vmatprep.subr.mxu0 0.0
        %800 = vmatpush1.msra.mxu0 0.0
        %801 = vmatprep.subr.mxu0 0.0
        %802 = vmatpush1.msra.mxu0 0.0
        %803 = vmatprep.subr.mxu0 0.0
        %804 = vmatpush1.msra.mxu0 0.0
        %805 = vmatprep.subr.mxu0 0.0
        %806 = vmatpush1.msra.mxu0 %v770
        %807 = vmatprep.subr.mxu0 0.0
        %808 = vmatpush1.msra.mxu0 %v769
        %809 = vmatprep.subr.mxu0 0.0
        %810 = vmatpush1.msra.mxu0 %v768
        %811 = vmatprep.subr.mxu0 0.0
        %812 = vmatpush1.msra.mxu0 %v767
        %813 = vmatprep.subr.mxu0 0.0
        %814 = vmatpush2.msra.mxu0 0.0
        %815 = vmatprep.subr.mxu0 0.0
        %816 = vmatpush2.msra.mxu0 0.0
        %817 = vmatprep.subr.mxu0 0.0
        %818 = vmatpush2.msra.mxu0 0.0
        %819 = vmatprep.subr.mxu0 0.0
        %820 = vmatpush2.msra.mxu0 0.0
        %821 = vmatprep.subr.mxu0 0.0
        %822 = vmatpush2.msra.mxu0 0.0
        %823 = vmatprep.subr.mxu0 0.0
        %824 = vmatpush2.msra.mxu0 0.0
        %825 = vmatprep.subr.mxu0 0.0
        %826 = vmatpush2.msra.mxu0 0.0
        %827 = vmatprep.subr.mxu0 0.0
        %828 = vmatpush2.msra.mxu0 0.0
        %829 = vmatprep.subr.mxu0 0.0
        %830 = vmatpush2.msra.mxu0 0.0
        %831 = vmatprep.subr.mxu0 0.0
        %832 = vmatpush2.msra.mxu0 0.0
        %833 = vmatprep.subr.mxu0 0.0
        %834 = vmatpush2.msra.mxu0 0.0
        %835 = vmatprep.subr.mxu0 0.0
        %836 = vmatpush2.msra.mxu0 0.0
        %837 = vmatprep.subr.mxu0 0.0
        %838 = vmatpush2.msra.mxu0 0.0
        %839 = vmatprep.subr.mxu0 0.0
        %840 = vmatpush2.msra.mxu0 0.0
        %841 = vmatprep.subr.mxu0 0.0
        %842 = vmatpush2.msra.mxu0 0.0
        %843 = vmatprep.subr.mxu0 0.0
        %844 = vmatpush2.msra.mxu0 0.0
        %845 = vmatprep.mubr.f32.mxu0 0.0
        %846 = vmatmul.mubr.f32.gmra.mxu0 %v779
        %v847 = vpop.f32.mrf.mxu0
        %v848 = vadd.f32 %v776, %v847
        %v849 = vpop.f32.mrf.mxu0
        %850 = vdwg.mxu0
        %852 = vrot.lane.b32.xlu0 %v763, 120
        %v853 = vpop.permute.xlu0 %852
        %854 = vrot.lane.b32.xlu0 %v763, 112
        %v855 = vpop.permute.xlu0 %854
        %856 = vrot.lane.b32.xlu0 %v763, 104
        %v857 = vpop.permute.xlu0 %856
        %859 = vrot.lane.b32.xlu0 %v848, 120
        %v860 = vpop.permute.xlu0 %859
        %862 = vrot.lane.b32.xlu0 %v848, 112
        %v863 = vpop.permute.xlu0 %862
        %865 = vrot.lane.b32.xlu0 %v848, 104
        %v866 = vpop.permute.xlu0 %865
        %v868 = vld [vmem:[#allocation2] sm:$0xff]
        %v869 = vld [vmem:[#allocation2 + $0x8] sm:$0xff]
        %v870 = vld [vmem:[#allocation2 + $0x10] sm:$0xff]
        %v871 = vld [vmem:[#allocation2 + $0x18] sm:$0xff]
        %vm872 = vcmask 64512
        %v874 = vsel %vm872, %v868, 0
        %v876 = vsel %vm872, %v763, 0
        %878 = vmatprep.subr.mxu0 0.0
        %879 = vmatpush1.xpose.msra.mxu0 0.0
        %880 = vmatprep.subr.mxu0 0.0
        %881 = vmatpush1.xpose.msra.mxu0 0.0
        %882 = vmatprep.subr.mxu0 0.0
        %883 = vmatpush1.xpose.msra.mxu0 0.0
        %884 = vmatprep.subr.mxu0 0.0
        %885 = vmatpush1.xpose.msra.mxu0 0.0
        %886 = vmatprep.subr.mxu0 0.0
        %887 = vmatpush1.xpose.msra.mxu0 0.0
        %888 = vmatprep.subr.mxu0 0.0
        %889 = vmatpush1.xpose.msra.mxu0 0.0
        %890 = vmatprep.subr.mxu0 0.0
        %891 = vmatpush1.xpose.msra.mxu0 0.0
        %892 = vmatprep.subr.mxu0 0.0
        %893 = vmatpush1.xpose.msra.mxu0 0.0
        %894 = vmatprep.subr.mxu0 0.0
        %895 = vmatpush1.xpose.msra.mxu0 0.0
        %896 = vmatprep.subr.mxu0 0.0
        %897 = vmatpush1.xpose.msra.mxu0 0.0
        %898 = vmatprep.subr.mxu0 0.0
        %899 = vmatpush1.xpose.msra.mxu0 0.0
        %900 = vmatprep.subr.mxu0 0.0
        %901 = vmatpush1.xpose.msra.mxu0 0.0
        %902 = vmatprep.subr.mxu0 0.0
        %903 = vmatpush1.xpose.msra.mxu0 0.0
        %904 = vmatprep.subr.mxu0 0.0
        %905 = vmatpush1.xpose.msra.mxu0 0.0
        %906 = vmatprep.subr.mxu0 0.0
        %907 = vmatpush1.xpose.msra.mxu0 0.0
        %908 = vmatprep.subr.mxu0 0.0
        %909 = vmatpush1.xpose.msra.mxu0 %v876
        %910 = vmatprep.subr.mxu0 0.0
        %911 = vmatpush2.xpose.msra.mxu0 0.0
        %912 = vmatprep.subr.mxu0 0.0
        %913 = vmatpush2.xpose.msra.mxu0 0.0
        %914 = vmatprep.subr.mxu0 0.0
        %915 = vmatpush2.xpose.msra.mxu0 0.0
        %916 = vmatprep.subr.mxu0 0.0
        %917 = vmatpush2.xpose.msra.mxu0 0.0
        %918 = vmatprep.subr.mxu0 0.0
        %919 = vmatpush2.xpose.msra.mxu0 0.0
        %920 = vmatprep.subr.mxu0 0.0
        %921 = vmatpush2.xpose.msra.mxu0 0.0
        %922 = vmatprep.subr.mxu0 0.0
        %923 = vmatpush2.xpose.msra.mxu0 0.0
        %924 = vmatprep.subr.mxu0 0.0
        %925 = vmatpush2.xpose.msra.mxu0 0.0
        %926 = vmatprep.subr.mxu0 0.0
        %927 = vmatpush2.xpose.msra.mxu0 0.0
        %928 = vmatprep.subr.mxu0 0.0
        %929 = vmatpush2.xpose.msra.mxu0 0.0
        %930 = vmatprep.subr.mxu0 0.0
        %931 = vmatpush2.xpose.msra.mxu0 0.0
        %932 = vmatprep.subr.mxu0 0.0
        %933 = vmatpush2.xpose.msra.mxu0 0.0
        %934 = vmatprep.subr.mxu0 0.0
        %935 = vmatpush2.xpose.msra.mxu0 0.0
        %936 = vmatprep.subr.mxu0 0.0
        %937 = vmatpush2.xpose.msra.mxu0 0.0
        %938 = vmatprep.subr.mxu0 0.0
        %939 = vmatpush2.xpose.msra.mxu0 0.0
        %940 = vmatprep.subr.mxu0 0.0
        %941 = vmatpush2.xpose.msra.mxu0 0.0
        %942 = vmatprep.mubr.f32.mxu0 0.0
        %943 = vmatmul.mubr.f32.gmra.mxu0 %v874
        %v944 = vpop.f32.mrf.mxu0
        %v945 = vadd.f32 0.0, %v944
        %v946 = vpop.f32.mrf.mxu0
        %947 = vdwg.mxu0
        %v949 = vsel %vm872, %v869, 0
        %v951 = vsel %vm872, %v853, 0
        %953 = vmatprep.subr.mxu0 0.0
        %954 = vmatpush1.xpose.msra.mxu0 0.0
        %955 = vmatprep.subr.mxu0 0.0
        %956 = vmatpush1.xpose.msra.mxu0 0.0
        %957 = vmatprep.subr.mxu0 0.0
        %958 = vmatpush1.xpose.msra.mxu0 0.0
        %959 = vmatprep.subr.mxu0 0.0
        %960 = vmatpush1.xpose.msra.mxu0 0.0
        %961 = vmatprep.subr.mxu0 0.0
        %962 = vmatpush1.xpose.msra.mxu0 0.0
        %963 = vmatprep.subr.mxu0 0.0
        %964 = vmatpush1.xpose.msra.mxu0 0.0
        %965 = vmatprep.subr.mxu0 0.0
        %966 = vmatpush1.xpose.msra.mxu0 0.0
        %967 = vmatprep.subr.mxu0 0.0
        %968 = vmatpush1.xpose.msra.mxu0 0.0
        %969 = vmatprep.subr.mxu0 0.0
        %970 = vmatpush1.xpose.msra.mxu0 0.0
        %971 = vmatprep.subr.mxu0 0.0
        %972 = vmatpush1.xpose.msra.mxu0 0.0
        %973 = vmatprep.subr.mxu0 0.0
        %974 = vmatpush1.xpose.msra.mxu0 0.0
        %975 = vmatprep.subr.mxu0 0.0
        %976 = vmatpush1.xpose.msra.mxu0 0.0
        %977 = vmatprep.subr.mxu0 0.0
        %978 = vmatpush1.xpose.msra.mxu0 0.0
        %979 = vmatprep.subr.mxu0 0.0
        %980 = vmatpush1.xpose.msra.mxu0 0.0
        %981 = vmatprep.subr.mxu0 0.0
        %982 = vmatpush1.xpose.msra.mxu0 0.0
        %983 = vmatprep.subr.mxu0 0.0
        %984 = vmatpush1.xpose.msra.mxu0 %v951
        %985 = vmatprep.subr.mxu0 0.0
        %986 = vmatpush2.xpose.msra.mxu0 0.0
        %987 = vmatprep.subr.mxu0 0.0
        %988 = vmatpush2.xpose.msra.mxu0 0.0
        %989 = vmatprep.subr.mxu0 0.0
        %990 = vmatpush2.xpose.msra.mxu0 0.0
        %991 = vmatprep.subr.mxu0 0.0
        %992 = vmatpush2.xpose.msra.mxu0 0.0
        %993 = vmatprep.subr.mxu0 0.0
        %994 = vmatpush2.xpose.msra.mxu0 0.0
        %995 = vmatprep.subr.mxu0 0.0
        %996 = vmatpush2.xpose.msra.mxu0 0.0
        %997 = vmatprep.subr.mxu0 0.0
        %998 = vmatpush2.xpose.msra.mxu0 0.0
        %999 = vmatprep.subr.mxu0 0.0
        %1000 = vmatpush2.xpose.msra.mxu0 0.0
        %1001 = vmatprep.subr.mxu0 0.0
        %1002 = vmatpush2.xpose.msra.mxu0 0.0
        %1003 = vmatprep.subr.mxu0 0.0
        %1004 = vmatpush2.xpose.msra.mxu0 0.0
        %1005 = vmatprep.subr.mxu0 0.0
        %1006 = vmatpush2.xpose.msra.mxu0 0.0
        %1007 = vmatprep.subr.mxu0 0.0
        %1008 = vmatpush2.xpose.msra.mxu0 0.0
        %1009 = vmatprep.subr.mxu0 0.0
        %1010 = vmatpush2.xpose.msra.mxu0 0.0
        %1011 = vmatprep.subr.mxu0 0.0
        %1012 = vmatpush2.xpose.msra.mxu0 0.0
        %1013 = vmatprep.subr.mxu0 0.0
        %1014 = vmatpush2.xpose.msra.mxu0 0.0
        %1015 = vmatprep.subr.mxu0 0.0
        %1016 = vmatpush2.xpose.msra.mxu0 0.0
        %1017 = vmatprep.mubr.f32.mxu0 0.0
        %1018 = vmatmul.mubr.f32.gmra.mxu0 %v949
        %v1019 = vpop.f32.mrf.mxu0
        %v1020 = vadd.f32 0.0, %v1019
        %v1021 = vpop.f32.mrf.mxu0
        %1022 = vdwg.mxu0
        %v1024 = vsel %vm872, %v870, 0
        %v1026 = vsel %vm872, %v855, 0
        %1028 = vmatprep.subr.mxu0 0.0
        %1029 = vmatpush1.xpose.msra.mxu0 0.0
        %1030 = vmatprep.subr.mxu0 0.0
        %1031 = vmatpush1.xpose.msra.mxu0 0.0
        %1032 = vmatprep.subr.mxu0 0.0
        %1033 = vmatpush1.xpose.msra.mxu0 0.0
        %1034 = vmatprep.subr.mxu0 0.0
        %1035 = vmatpush1.xpose.msra.mxu0 0.0
        %1036 = vmatprep.subr.mxu0 0.0
        %1037 = vmatpush1.xpose.msra.mxu0 0.0
        %1038 = vmatprep.subr.mxu0 0.0
        %1039 = vmatpush1.xpose.msra.mxu0 0.0
        %1040 = vmatprep.subr.mxu0 0.0
        %1041 = vmatpush1.xpose.msra.mxu0 0.0
        %1042 = vmatprep.subr.mxu0 0.0
        %1043 = vmatpush1.xpose.msra.mxu0 0.0
        %1044 = vmatprep.subr.mxu0 0.0
        %1045 = vmatpush1.xpose.msra.mxu0 0.0
        %1046 = vmatprep.subr.mxu0 0.0
        %1047 = vmatpush1.xpose.msra.mxu0 0.0
        %1048 = vmatprep.subr.mxu0 0.0
        %1049 = vmatpush1.xpose.msra.mxu0 0.0
        %1050 = vmatprep.subr.mxu0 0.0
        %1051 = vmatpush1.xpose.msra.mxu0 0.0
        %1052 = vmatprep.subr.mxu0 0.0
        %1053 = vmatpush1.xpose.msra.mxu0 0.0
        %1054 = vmatprep.subr.mxu0 0.0
        %1055 = vmatpush1.xpose.msra.mxu0 0.0
        %1056 = vmatprep.subr.mxu0 0.0
        %1057 = vmatpush1.xpose.msra.mxu0 0.0
        %1058 = vmatprep.subr.mxu0 0.0
        %1059 = vmatpush1.xpose.msra.mxu0 %v1026
        %1060 = vmatprep.subr.mxu0 0.0
        %1061 = vmatpush2.xpose.msra.mxu0 0.0
        %1062 = vmatprep.subr.mxu0 0.0
        %1063 = vmatpush2.xpose.msra.mxu0 0.0
        %1064 = vmatprep.subr.mxu0 0.0
        %1065 = vmatpush2.xpose.msra.mxu0 0.0
        %1066 = vmatprep.subr.mxu0 0.0
        %1067 = vmatpush2.xpose.msra.mxu0 0.0
        %1068 = vmatprep.subr.mxu0 0.0
        %1069 = vmatpush2.xpose.msra.mxu0 0.0
        %1070 = vmatprep.subr.mxu0 0.0
        %1071 = vmatpush2.xpose.msra.mxu0 0.0
        %1072 = vmatprep.subr.mxu0 0.0
        %1073 = vmatpush2.xpose.msra.mxu0 0.0
        %1074 = vmatprep.subr.mxu0 0.0
        %1075 = vmatpush2.xpose.msra.mxu0 0.0
        %1076 = vmatprep.subr.mxu0 0.0
        %1077 = vmatpush2.xpose.msra.mxu0 0.0
        %1078 = vmatprep.subr.mxu0 0.0
        %1079 = vmatpush2.xpose.msra.mxu0 0.0
        %1080 = vmatprep.subr.mxu0 0.0
        %1081 = vmatpush2.xpose.msra.mxu0 0.0
        %1082 = vmatprep.subr.mxu0 0.0
        %1083 = vmatpush2.xpose.msra.mxu0 0.0
        %1084 = vmatprep.subr.mxu0 0.0
        %1085 = vmatpush2.xpose.msra.mxu0 0.0
        %1086 = vmatprep.subr.mxu0 0.0
        %1087 = vmatpush2.xpose.msra.mxu0 0.0
        %1088 = vmatprep.subr.mxu0 0.0
        %1089 = vmatpush2.xpose.msra.mxu0 0.0
        %1090 = vmatprep.subr.mxu0 0.0
        %1091 = vmatpush2.xpose.msra.mxu0 0.0
        %1092 = vmatprep.mubr.f32.mxu0 0.0
        %1093 = vmatmul.mubr.f32.gmra.mxu0 %v1024
        %v1094 = vpop.f32.mrf.mxu0
        %v1095 = vadd.f32 0.0, %v1094
        %v1096 = vpop.f32.mrf.mxu0
        %1097 = vdwg.mxu0
        %v1099 = vsel %vm872, %v871, 0
        %v1101 = vsel %vm872, %v857, 0
        %1103 = vmatprep.subr.mxu0 0.0
        %1104 = vmatpush1.xpose.msra.mxu0 0.0
        %1105 = vmatprep.subr.mxu0 0.0
        %1106 = vmatpush1.xpose.msra.mxu0 0.0
        %1107 = vmatprep.subr.mxu0 0.0
        %1108 = vmatpush1.xpose.msra.mxu0 0.0
        %1109 = vmatprep.subr.mxu0 0.0
        %1110 = vmatpush1.xpose.msra.mxu0 0.0
        %1111 = vmatprep.subr.mxu0 0.0
        %1112 = vmatpush1.xpose.msra.mxu0 0.0
        %1113 = vmatprep.subr.mxu0 0.0
        %1114 = vmatpush1.xpose.msra.mxu0 0.0
        %1115 = vmatprep.subr.mxu0 0.0
        %1116 = vmatpush1.xpose.msra.mxu0 0.0
        %1117 = vmatprep.subr.mxu0 0.0
        %1118 = vmatpush1.xpose.msra.mxu0 0.0
        %1119 = vmatprep.subr.mxu0 0.0
        %1120 = vmatpush1.xpose.msra.mxu0 0.0
        %1121 = vmatprep.subr.mxu0 0.0
        %1122 = vmatpush1.xpose.msra.mxu0 0.0
        %1123 = vmatprep.subr.mxu0 0.0
        %1124 = vmatpush1.xpose.msra.mxu0 0.0
        %1125 = vmatprep.subr.mxu0 0.0
        %1126 = vmatpush1.xpose.msra.mxu0 0.0
        %1127 = vmatprep.subr.mxu0 0.0
        %1128 = vmatpush1.xpose.msra.mxu0 0.0
        %1129 = vmatprep.subr.mxu0 0.0
        %1130 = vmatpush1.xpose.msra.mxu0 0.0
        %1131 = vmatprep.subr.mxu0 0.0
        %1132 = vmatpush1.xpose.msra.mxu0 0.0
        %1133 = vmatprep.subr.mxu0 0.0
        %1134 = vmatpush1.xpose.msra.mxu0 %v1101
        %1135 = vmatprep.subr.mxu0 0.0
        %1136 = vmatpush2.xpose.msra.mxu0 0.0
        %1137 = vmatprep.subr.mxu0 0.0
        %1138 = vmatpush2.xpose.msra.mxu0 0.0
        %1139 = vmatprep.subr.mxu0 0.0
        %1140 = vmatpush2.xpose.msra.mxu0 0.0
        %1141 = vmatprep.subr.mxu0 0.0
        %1142 = vmatpush2.xpose.msra.mxu0 0.0
        %1143 = vmatprep.subr.mxu0 0.0
        %1144 = vmatpush2.xpose.msra.mxu0 0.0
        %1145 = vmatprep.subr.mxu0 0.0
        %1146 = vmatpush2.xpose.msra.mxu0 0.0
        %1147 = vmatprep.subr.mxu0 0.0
        %1148 = vmatpush2.xpose.msra.mxu0 0.0
        %1149 = vmatprep.subr.mxu0 0.0
        %1150 = vmatpush2.xpose.msra.mxu0 0.0
        %1151 = vmatprep.subr.mxu0 0.0
        %1152 = vmatpush2.xpose.msra.mxu0 0.0
        %1153 = vmatprep.subr.mxu0 0.0
        %1154 = vmatpush2.xpose.msra.mxu0 0.0
        %1155 = vmatprep.subr.mxu0 0.0
        %1156 = vmatpush2.xpose.msra.mxu0 0.0
        %1157 = vmatprep.subr.mxu0 0.0
        %1158 = vmatpush2.xpose.msra.mxu0 0.0
        %1159 = vmatprep.subr.mxu0 0.0
        %1160 = vmatpush2.xpose.msra.mxu0 0.0
        %1161 = vmatprep.subr.mxu0 0.0
        %1162 = vmatpush2.xpose.msra.mxu0 0.0
        %1163 = vmatprep.subr.mxu0 0.0
        %1164 = vmatpush2.xpose.msra.mxu0 0.0
        %1165 = vmatprep.subr.mxu0 0.0
        %1166 = vmatpush2.xpose.msra.mxu0 0.0
        %1167 = vmatprep.mubr.f32.mxu0 0.0
        %1168 = vmatmul.mubr.f32.gmra.mxu0 %v1099
        %v1169 = vpop.f32.mrf.mxu0
        %v1170 = vadd.f32 0.0, %v1169
        %v1171 = vpop.f32.mrf.mxu0
        %1172 = vdwg.mxu0
        %v1173 = vld [vmem:[#allocation3] sm:$0xff]
        %v1174 = vld [vmem:[#allocation3 + $0x8] sm:$0xff]
        %v1175 = vld [vmem:[#allocation3 + $0x10] sm:$0xff]
        %v1176 = vld [vmem:[#allocation3 + $0x18] sm:$0xff]
        %v1177 = vsel %vm872, %v945, -inf
        %1178 = vmax.xlane.f32.xlu0 %v1177
        %v1179 = vpop.xlane.xlu0 %1178
        %v1180 = vsel %vm872, %v1020, -inf
        %1181 = vmax.xlane.f32.xlu0 %v1180
        %v1182 = vpop.xlane.xlu0 %1181
        %v1183 = vsel %vm872, %v1095, -inf
        %1184 = vmax.xlane.f32.xlu0 %v1183
        %v1185 = vpop.xlane.xlu0 %1184
        %v1186 = vsel %vm872, %v1170, -inf
        %1187 = vmax.xlane.f32.xlu0 %v1186
        %v1188 = vpop.xlane.xlu0 %1187
        %v1189 = vmax.f32 %v1173, %v1179
        %v1190 = vmax.f32 %v1174, %v1182
        %v1191 = vmax.f32 %v1175, %v1185
        %v1192 = vmax.f32 %v1176, %v1188
        %v1193 = vsub.f32 %v1173, %v1189
        %v1194 = vsub.f32 %v1174, %v1190
        %v1195 = vsub.f32 %v1175, %v1191
        %v1196 = vsub.f32 %v1176, %v1192
        %v1197 = vmul.f32 %v1193, 1.442695
        %v1198 = vpow.pop %v1197
        %v1199 = vmul.f32 %v1194, 1.442695
        %v1200 = vpow.pop %v1199
        %v1201 = vmul.f32 %v1195, 1.442695
        %v1202 = vpow.pop %v1201
        %v1203 = vmul.f32 %v1196, 1.442695
        %v1204 = vpow.pop %v1203
        %1206 = vset.pattern.permute.xlu0 0
        %1207 = vperm.xlu0 %1206, %v1189
        %v1208 = vpop.permute.xlu0 %1207
        %1211 = vset.pattern.permute.xlu0 0
        %1212 = vperm.xlu0 %1211, %v1190
        %v1213 = vpop.permute.xlu0 %1212
        %1216 = vset.pattern.permute.xlu0 0
        %1217 = vperm.xlu0 %1216, %v1191
        %v1218 = vpop.permute.xlu0 %1217
        %1221 = vset.pattern.permute.xlu0 0
        %1222 = vperm.xlu0 %1221, %v1192
        %v1223 = vpop.permute.xlu0 %1222
        %v1225 = vsub.f32 %v945, %v1208
        %v1226 = vsub.f32 %v1020, %v1213
        %v1227 = vsub.f32 %v1095, %v1218
        %v1228 = vsub.f32 %v1170, %v1223
        %v1229 = vmul.f32 %v1225, 1.442695
        %v1230 = vpow.pop %v1229
        %v1231 = vmul.f32 %v1226, 1.442695
        %v1232 = vpow.pop %v1231
        %v1233 = vmul.f32 %v1227, 1.442695
        %v1234 = vpow.pop %v1233
        %v1235 = vmul.f32 %v1228, 1.442695
        %v1236 = vpow.pop %v1235
        %v1237 = vld [vmem:[#allocation4] sm:$0xff]
        %v1238 = vld [vmem:[#allocation4 + $0x8] sm:$0xff]
        %v1239 = vld [vmem:[#allocation4 + $0x10] sm:$0xff]
        %v1240 = vld [vmem:[#allocation4 + $0x18] sm:$0xff]
        %v1241 = vmul.f32 %v1198, %v1237
        %v1242 = vmul.f32 %v1200, %v1238
        %v1243 = vmul.f32 %v1202, %v1239
        %v1244 = vmul.f32 %v1204, %v1240
        %v1245 = vsel %vm872, %v1230, 0.0
        %1246 = vadd.xlane.f32.xlu0 %v1245
        %v1247 = vpop.xlane.xlu0 %1246
        %v1248 = vsel %vm872, %v1232, 0.0
        %1249 = vadd.xlane.f32.xlu0 %v1248
        %v1250 = vpop.xlane.xlu0 %1249
        %v1251 = vsel %vm872, %v1234, 0.0
        %1252 = vadd.xlane.f32.xlu0 %v1251
        %v1253 = vpop.xlane.xlu0 %1252
        %v1254 = vsel %vm872, %v1236, 0.0
        %1255 = vadd.xlane.f32.xlu0 %v1254
        %v1256 = vpop.xlane.xlu0 %1255
        %v1257 = vadd.f32 %v1241, %v1247
        %v1258 = vadd.f32 %v1242, %v1250
        %v1259 = vadd.f32 %v1243, %v1253
        %v1260 = vadd.f32 %v1244, %v1256
        %vm1261 = vcmask 7168
        %1262 = vst.msk [vmem:[#allocation4] sm:$0xff] %vm1261, %v1257
        %1263 = vst.msk [vmem:[#allocation4 + $0x8] sm:$0xff] %vm1261, %v1258
        %1264 = vst.msk [vmem:[#allocation4 + $0x10] sm:$0xff] %vm1261, %v1259
        %1265 = vst.msk [vmem:[#allocation4 + $0x18] sm:$0xff] %vm1261, %v1260
        %v1266 = vld [vmem:[#allocation5] sm:$0xff]
        %v1267 = vld [vmem:[#allocation5 + $0x8] sm:$0xff]
        %v1268 = vld [vmem:[#allocation5 + $0x10] sm:$0xff]
        %v1269 = vld [vmem:[#allocation5 + $0x18] sm:$0xff]
        %1271 = vset.pattern.permute.xlu0 0
        %1272 = vperm.xlu0 %1271, %v1198
        %v1273 = vpop.permute.xlu0 %1272
        %1276 = vset.pattern.permute.xlu0 0
        %1277 = vperm.xlu0 %1276, %v1200
        %v1278 = vpop.permute.xlu0 %1277
        %1281 = vset.pattern.permute.xlu0 0
        %1282 = vperm.xlu0 %1281, %v1202
        %v1283 = vpop.permute.xlu0 %1282
        %1286 = vset.pattern.permute.xlu0 0
        %1287 = vperm.xlu0 %1286, %v1204
        %v1288 = vpop.permute.xlu0 %1287
        %v1290 = vmul.f32 %v1273, %v1266
        %v1291 = vmul.f32 %v1278, %v1267
        %v1292 = vmul.f32 %v1283, %v1268
        %v1293 = vmul.f32 %v1288, %v1269
        %v1295 = vsel %vm872, %v1230, 0
        %1297 = vmatprep.subr.mxu0 0.0
        %1298 = vmatpush1.msra.mxu0 0.0
        %1299 = vmatprep.subr.mxu0 0.0
        %1300 = vmatpush1.msra.mxu0 0.0
        %1301 = vmatprep.subr.mxu0 0.0
        %1302 = vmatpush1.msra.mxu0 0.0
        %1303 = vmatprep.subr.mxu0 0.0
        %1304 = vmatpush1.msra.mxu0 0.0
        %1305 = vmatprep.subr.mxu0 0.0
        %1306 = vmatpush1.msra.mxu0 0.0
        %1307 = vmatprep.subr.mxu0 0.0
        %1308 = vmatpush1.msra.mxu0 0.0
        %1309 = vmatprep.subr.mxu0 0.0
        %1310 = vmatpush1.msra.mxu0 0.0
        %1311 = vmatprep.subr.mxu0 0.0
        %1312 = vmatpush1.msra.mxu0 0.0
        %1313 = vmatprep.subr.mxu0 0.0
        %1314 = vmatpush1.msra.mxu0 0.0
        %1315 = vmatprep.subr.mxu0 0.0
        %1316 = vmatpush1.msra.mxu0 0.0
        %1317 = vmatprep.subr.mxu0 0.0
        %1318 = vmatpush1.msra.mxu0 0.0
        %1319 = vmatprep.subr.mxu0 0.0
        %1320 = vmatpush1.msra.mxu0 0.0
        %1321 = vmatprep.subr.mxu0 0.0
        %1322 = vmatpush1.msra.mxu0 0.0
        %1323 = vmatprep.subr.mxu0 0.0
        %1324 = vmatpush1.msra.mxu0 0.0
        %1325 = vmatprep.subr.mxu0 0.0
        %1326 = vmatpush1.msra.mxu0 0.0
        %1327 = vmatprep.subr.mxu0 0.0
        %1328 = vmatpush1.msra.mxu0 %v848
        %1329 = vmatprep.subr.mxu0 0.0
        %1330 = vmatpush2.msra.mxu0 0.0
        %1331 = vmatprep.subr.mxu0 0.0
        %1332 = vmatpush2.msra.mxu0 0.0
        %1333 = vmatprep.subr.mxu0 0.0
        %1334 = vmatpush2.msra.mxu0 0.0
        %1335 = vmatprep.subr.mxu0 0.0
        %1336 = vmatpush2.msra.mxu0 0.0
        %1337 = vmatprep.subr.mxu0 0.0
        %1338 = vmatpush2.msra.mxu0 0.0
        %1339 = vmatprep.subr.mxu0 0.0
        %1340 = vmatpush2.msra.mxu0 0.0
        %1341 = vmatprep.subr.mxu0 0.0
        %1342 = vmatpush2.msra.mxu0 0.0
        %1343 = vmatprep.subr.mxu0 0.0
        %1344 = vmatpush2.msra.mxu0 0.0
        %1345 = vmatprep.subr.mxu0 0.0
        %1346 = vmatpush2.msra.mxu0 0.0
        %1347 = vmatprep.subr.mxu0 0.0
        %1348 = vmatpush2.msra.mxu0 0.0
        %1349 = vmatprep.subr.mxu0 0.0
        %1350 = vmatpush2.msra.mxu0 0.0
        %1351 = vmatprep.subr.mxu0 0.0
        %1352 = vmatpush2.msra.mxu0 0.0
        %1353 = vmatprep.subr.mxu0 0.0
        %1354 = vmatpush2.msra.mxu0 0.0
        %1355 = vmatprep.subr.mxu0 0.0
        %1356 = vmatpush2.msra.mxu0 0.0
        %1357 = vmatprep.subr.mxu0 0.0
        %1358 = vmatpush2.msra.mxu0 0.0
        %1359 = vmatprep.subr.mxu0 0.0
        %1360 = vmatpush2.msra.mxu0 0.0
        %1361 = vmatprep.mubr.f32.mxu0 0.0
        %1362 = vmatmul.mubr.f32.gmra.mxu0 %v1295
        %v1363 = vpop.f32.mrf.mxu0
        %v1364 = vadd.f32 0.0, %v1363
        %v1365 = vpop.f32.mrf.mxu0
        %1366 = vdwg.mxu0
        %v1368 = vsel %vm872, %v1232, 0
        %1370 = vmatprep.subr.mxu0 0.0
        %1371 = vmatpush1.msra.mxu0 0.0
        %1372 = vmatprep.subr.mxu0 0.0
        %1373 = vmatpush1.msra.mxu0 0.0
        %1374 = vmatprep.subr.mxu0 0.0
        %1375 = vmatpush1.msra.mxu0 0.0
        %1376 = vmatprep.subr.mxu0 0.0
        %1377 = vmatpush1.msra.mxu0 0.0
        %1378 = vmatprep.subr.mxu0 0.0
        %1379 = vmatpush1.msra.mxu0 0.0
        %1380 = vmatprep.subr.mxu0 0.0
        %1381 = vmatpush1.msra.mxu0 0.0
        %1382 = vmatprep.subr.mxu0 0.0
        %1383 = vmatpush1.msra.mxu0 0.0
        %1384 = vmatprep.subr.mxu0 0.0
        %1385 = vmatpush1.msra.mxu0 0.0
        %1386 = vmatprep.subr.mxu0 0.0
        %1387 = vmatpush1.msra.mxu0 0.0
        %1388 = vmatprep.subr.mxu0 0.0
        %1389 = vmatpush1.msra.mxu0 0.0
        %1390 = vmatprep.subr.mxu0 0.0
        %1391 = vmatpush1.msra.mxu0 0.0
        %1392 = vmatprep.subr.mxu0 0.0
        %1393 = vmatpush1.msra.mxu0 0.0
        %1394 = vmatprep.subr.mxu0 0.0
        %1395 = vmatpush1.msra.mxu0 0.0
        %1396 = vmatprep.subr.mxu0 0.0
        %1397 = vmatpush1.msra.mxu0 0.0
        %1398 = vmatprep.subr.mxu0 0.0
        %1399 = vmatpush1.msra.mxu0 0.0
        %1400 = vmatprep.subr.mxu0 0.0
        %1401 = vmatpush1.msra.mxu0 %v860
        %1402 = vmatprep.subr.mxu0 0.0
        %1403 = vmatpush2.msra.mxu0 0.0
        %1404 = vmatprep.subr.mxu0 0.0
        %1405 = vmatpush2.msra.mxu0 0.0
        %1406 = vmatprep.subr.mxu0 0.0
        %1407 = vmatpush2.msra.mxu0 0.0
        %1408 = vmatprep.subr.mxu0 0.0
        %1409 = vmatpush2.msra.mxu0 0.0
        %1410 = vmatprep.subr.mxu0 0.0
        %1411 = vmatpush2.msra.mxu0 0.0
        %1412 = vmatprep.subr.mxu0 0.0
        %1413 = vmatpush2.msra.mxu0 0.0
        %1414 = vmatprep.subr.mxu0 0.0
        %1415 = vmatpush2.msra.mxu0 0.0
        %1416 = vmatprep.subr.mxu0 0.0
        %1417 = vmatpush2.msra.mxu0 0.0
        %1418 = vmatprep.subr.mxu0 0.0
        %1419 = vmatpush2.msra.mxu0 0.0
        %1420 = vmatprep.subr.mxu0 0.0
        %1421 = vmatpush2.msra.mxu0 0.0
        %1422 = vmatprep.subr.mxu0 0.0
        %1423 = vmatpush2.msra.mxu0 0.0
        %1424 = vmatprep.subr.mxu0 0.0
        %1425 = vmatpush2.msra.mxu0 0.0
        %1426 = vmatprep.subr.mxu0 0.0
        %1427 = vmatpush2.msra.mxu0 0.0
        %1428 = vmatprep.subr.mxu0 0.0
        %1429 = vmatpush2.msra.mxu0 0.0
        %1430 = vmatprep.subr.mxu0 0.0
        %1431 = vmatpush2.msra.mxu0 0.0
        %1432 = vmatprep.subr.mxu0 0.0
        %1433 = vmatpush2.msra.mxu0 0.0
        %1434 = vmatprep.mubr.f32.mxu0 0.0
        %1435 = vmatmul.mubr.f32.gmra.mxu0 %v1368
        %v1436 = vpop.f32.mrf.mxu0
        %v1437 = vadd.f32 0.0, %v1436
        %v1438 = vpop.f32.mrf.mxu0
        %1439 = vdwg.mxu0
        %v1441 = vsel %vm872, %v1234, 0
        %1443 = vmatprep.subr.mxu0 0.0
        %1444 = vmatpush1.msra.mxu0 0.0
        %1445 = vmatprep.subr.mxu0 0.0
        %1446 = vmatpush1.msra.mxu0 0.0
        %1447 = vmatprep.subr.mxu0 0.0
        %1448 = vmatpush1.msra.mxu0 0.0
        %1449 = vmatprep.subr.mxu0 0.0
        %1450 = vmatpush1.msra.mxu0 0.0
        %1451 = vmatprep.subr.mxu0 0.0
        %1452 = vmatpush1.msra.mxu0 0.0
        %1453 = vmatprep.subr.mxu0 0.0
        %1454 = vmatpush1.msra.mxu0 0.0
        %1455 = vmatprep.subr.mxu0 0.0
        %1456 = vmatpush1.msra.mxu0 0.0
        %1457 = vmatprep.subr.mxu0 0.0
        %1458 = vmatpush1.msra.mxu0 0.0
        %1459 = vmatprep.subr.mxu0 0.0
        %1460 = vmatpush1.msra.mxu0 0.0
        %1461 = vmatprep.subr.mxu0 0.0
        %1462 = vmatpush1.msra.mxu0 0.0
        %1463 = vmatprep.subr.mxu0 0.0
        %1464 = vmatpush1.msra.mxu0 0.0
        %1465 = vmatprep.subr.mxu0 0.0
        %1466 = vmatpush1.msra.mxu0 0.0
        %1467 = vmatprep.subr.mxu0 0.0
        %1468 = vmatpush1.msra.mxu0 0.0
        %1469 = vmatprep.subr.mxu0 0.0
        %1470 = vmatpush1.msra.mxu0 0.0
        %1471 = vmatprep.subr.mxu0 0.0
        %1472 = vmatpush1.msra.mxu0 0.0
        %1473 = vmatprep.subr.mxu0 0.0
        %1474 = vmatpush1.msra.mxu0 %v863
        %1475 = vmatprep.subr.mxu0 0.0
        %1476 = vmatpush2.msra.mxu0 0.0
        %1477 = vmatprep.subr.mxu0 0.0
        %1478 = vmatpush2.msra.mxu0 0.0
        %1479 = vmatprep.subr.mxu0 0.0
        %1480 = vmatpush2.msra.mxu0 0.0
        %1481 = vmatprep.subr.mxu0 0.0
        %1482 = vmatpush2.msra.mxu0 0.0
        %1483 = vmatprep.subr.mxu0 0.0
        %1484 = vmatpush2.msra.mxu0 0.0
        %1485 = vmatprep.subr.mxu0 0.0
        %1486 = vmatpush2.msra.mxu0 0.0
        %1487 = vmatprep.subr.mxu0 0.0
        %1488 = vmatpush2.msra.mxu0 0.0
        %1489 = vmatprep.subr.mxu0 0.0
        %1490 = vmatpush2.msra.mxu0 0.0
        %1491 = vmatprep.subr.mxu0 0.0
        %1492 = vmatpush2.msra.mxu0 0.0
        %1493 = vmatprep.subr.mxu0 0.0
        %1494 = vmatpush2.msra.mxu0 0.0
        %1495 = vmatprep.subr.mxu0 0.0
        %1496 = vmatpush2.msra.mxu0 0.0
        %1497 = vmatprep.subr.mxu0 0.0
        %1498 = vmatpush2.msra.mxu0 0.0
        %1499 = vmatprep.subr.mxu0 0.0
        %1500 = vmatpush2.msra.mxu0 0.0
        %1501 = vmatprep.subr.mxu0 0.0
        %1502 = vmatpush2.msra.mxu0 0.0
        %1503 = vmatprep.subr.mxu0 0.0
        %1504 = vmatpush2.msra.mxu0 0.0
        %1505 = vmatprep.subr.mxu0 0.0
        %1506 = vmatpush2.msra.mxu0 0.0
        %1507 = vmatprep.mubr.f32.mxu0 0.0
        %1508 = vmatmul.mubr.f32.gmra.mxu0 %v1441
        %v1509 = vpop.f32.mrf.mxu0
        %v1510 = vadd.f32 0.0, %v1509
        %v1511 = vpop.f32.mrf.mxu0
        %1512 = vdwg.mxu0
        %v1514 = vsel %vm872, %v1236, 0
        %1516 = vmatprep.subr.mxu0 0.0
        %1517 = vmatpush1.msra.mxu0 0.0
        %1518 = vmatprep.subr.mxu0 0.0
        %1519 = vmatpush1.msra.mxu0 0.0
        %1520 = vmatprep.subr.mxu0 0.0
        %1521 = vmatpush1.msra.mxu0 0.0
        %1522 = vmatprep.subr.mxu0 0.0
        %1523 = vmatpush1.msra.mxu0 0.0
        %1524 = vmatprep.subr.mxu0 0.0
        %1525 = vmatpush1.msra.mxu0 0.0
        %1526 = vmatprep.subr.mxu0 0.0
        %1527 = vmatpush1.msra.mxu0 0.0
        %1528 = vmatprep.subr.mxu0 0.0
        %1529 = vmatpush1.msra.mxu0 0.0
        %1530 = vmatprep.subr.mxu0 0.0
        %1531 = vmatpush1.msra.mxu0 0.0
        %1532 = vmatprep.subr.mxu0 0.0
        %1533 = vmatpush1.msra.mxu0 0.0
        %1534 = vmatprep.subr.mxu0 0.0
        %1535 = vmatpush1.msra.mxu0 0.0
        %1536 = vmatprep.subr.mxu0 0.0
        %1537 = vmatpush1.msra.mxu0 0.0
        %1538 = vmatprep.subr.mxu0 0.0
        %1539 = vmatpush1.msra.mxu0 0.0
        %1540 = vmatprep.subr.mxu0 0.0
        %1541 = vmatpush1.msra.mxu0 0.0
        %1542 = vmatprep.subr.mxu0 0.0
        %1543 = vmatpush1.msra.mxu0 0.0
        %1544 = vmatprep.subr.mxu0 0.0
        %1545 = vmatpush1.msra.mxu0 0.0
        %1546 = vmatprep.subr.mxu0 0.0
        %1547 = vmatpush1.msra.mxu0 %v866
        %1548 = vmatprep.subr.mxu0 0.0
        %1549 = vmatpush2.msra.mxu0 0.0
        %1550 = vmatprep.subr.mxu0 0.0
        %1551 = vmatpush2.msra.mxu0 0.0
        %1552 = vmatprep.subr.mxu0 0.0
        %1553 = vmatpush2.msra.mxu0 0.0
        %1554 = vmatprep.subr.mxu0 0.0
        %1555 = vmatpush2.msra.mxu0 0.0
        %1556 = vmatprep.subr.mxu0 0.0
        %1557 = vmatpush2.msra.mxu0 0.0
        %1558 = vmatprep.subr.mxu0 0.0
        %1559 = vmatpush2.msra.mxu0 0.0
        %1560 = vmatprep.subr.mxu0 0.0
        %1561 = vmatpush2.msra.mxu0 0.0
        %1562 = vmatprep.subr.mxu0 0.0
        %1563 = vmatpush2.msra.mxu0 0.0
        %1564 = vmatprep.subr.mxu0 0.0
        %1565 = vmatpush2.msra.mxu0 0.0
        %1566 = vmatprep.subr.mxu0 0.0
        %1567 = vmatpush2.msra.mxu0 0.0
        %1568 = vmatprep.subr.mxu0 0.0
        %1569 = vmatpush2.msra.mxu0 0.0
        %1570 = vmatprep.subr.mxu0 0.0
        %1571 = vmatpush2.msra.mxu0 0.0
        %1572 = vmatprep.subr.mxu0 0.0
        %1573 = vmatpush2.msra.mxu0 0.0
        %1574 = vmatprep.subr.mxu0 0.0
        %1575 = vmatpush2.msra.mxu0 0.0
        %1576 = vmatprep.subr.mxu0 0.0
        %1577 = vmatpush2.msra.mxu0 0.0
        %1578 = vmatprep.subr.mxu0 0.0
        %1579 = vmatpush2.msra.mxu0 0.0
        %1580 = vmatprep.mubr.f32.mxu0 0.0
        %1581 = vmatmul.mubr.f32.gmra.mxu0 %v1514
        %v1582 = vpop.f32.mrf.mxu0
        %v1583 = vadd.f32 0.0, %v1582
        %v1584 = vpop.f32.mrf.mxu0
        %1585 = vdwg.mxu0
        %v1586 = vadd.f32 %v1290, %v1364
        %v1587 = vadd.f32 %v1291, %v1437
        %v1588 = vadd.f32 %v1292, %v1510
        %v1589 = vadd.f32 %v1293, %v1583
        %1590 = vst.msk [vmem:[#allocation5] sm:$0xff] %vm872, %v1586
        %1591 = vst.msk [vmem:[#allocation5 + $0x8] sm:$0xff] %vm872, %v1587
        %1592 = vst.msk [vmem:[#allocation5 + $0x10] sm:$0xff] %vm872, %v1588
        %1593 = vst.msk [vmem:[#allocation5 + $0x18] sm:$0xff] %vm872, %v1589
        %1594 = vst.msk [vmem:[#allocation3] sm:$0xff] %vm1261, %v1189
        %1595 = vst.msk [vmem:[#allocation3 + $0x8] sm:$0xff] %vm1261, %v1190
        %1596 = vst.msk [vmem:[#allocation3 + $0x10] sm:$0xff] %vm1261, %v1191
        %1597 = vst.msk [vmem:[#allocation3 + $0x18] sm:$0xff] %vm1261, %v1192
        // Predicated region
        $region97: #{tpu_custom_call.1} parent=63 // pred_check
          %p1598 = pneg %p561
        $region98: #{tpu_custom_call.1} parent=63 // pred_check_branch
          %1600 = sbr.rel (%p1598) target = $region100
        $region99: #{tpu_custom_call.1} parent=63 // pred_region
          %v1601 = vld [vmem:[#allocation4] sm:$0xff]
          %v1602 = vld [vmem:[#allocation4 + $0x8] sm:$0xff]
          %v1603 = vld [vmem:[#allocation4 + $0x10] sm:$0xff]
          %v1604 = vld [vmem:[#allocation4 + $0x18] sm:$0xff]
          %v1605 = vrcp.pop %v1601
          %v1606 = vrcp.pop %v1602
          %v1607 = vrcp.pop %v1603
          %v1608 = vrcp.pop %v1604
          %v1609 = vld [vmem:[#allocation5] sm:$0xff]
          %v1610 = vld [vmem:[#allocation5 + $0x8] sm:$0xff]
          %v1611 = vld [vmem:[#allocation5 + $0x10] sm:$0xff]
          %v1612 = vld [vmem:[#allocation5 + $0x18] sm:$0xff]
          %1614 = vset.pattern.permute.xlu0 0
          %1615 = vperm.xlu0 %1614, %v1605
          %v1616 = vpop.permute.xlu0 %1615
          %1619 = vset.pattern.permute.xlu0 0
          %1620 = vperm.xlu0 %1619, %v1606
          %v1621 = vpop.permute.xlu0 %1620
          %1624 = vset.pattern.permute.xlu0 0
          %1625 = vperm.xlu0 %1624, %v1607
          %v1626 = vpop.permute.xlu0 %1625
          %1629 = vset.pattern.permute.xlu0 0
          %1630 = vperm.xlu0 %1629, %v1608
          %v1631 = vpop.permute.xlu0 %1630
          %v1633 = vmul.f32 %v1609, %v1616
          %v1634 = vmul.f32 %v1610, %v1621
          %v1635 = vmul.f32 %v1611, %v1626
          %v1636 = vmul.f32 %v1612, %v1631
          %1638 = vrot.lane.b32.xlu0 %v1634, 8
          %v1639 = vpop.permute.xlu0 %1638
          %1642 = vrot.lane.b32.xlu0 %v1635, 16
          %v1643 = vpop.permute.xlu0 %1642
          %1646 = vrot.lane.b32.xlu0 %v1636, 24
          %v1647 = vpop.permute.xlu0 %1646
          %v1649 = vsel %vm872, %v1633, %v1639
          %vm1650 = vcmask 130048
          %v1651 = vsel %vm1650, %v1649, %v1643
          %vm1652 = vcmask 195584
          %v1653 = vsel %vm1652, %v1651, %v1647
          %v1654 = vld [vmem:[#allocation17] sm:$0xff]
          %v1655 = vld [vmem:[#allocation17 + $0x8] sm:$0xff]
          %v1656 = vld [vmem:[#allocation17 + $0x10] sm:$0xff]
          %v1657 = vld [vmem:[#allocation17 + $0x18] sm:$0xff]
          %v1658 = vld [vmem:[%s10] sm:$0x1]
          %v1660 = vlaneseq
          %v1661 = vshrl.u32 %v1660, 7
          %v1662 = vsub.s32 0, %v1661
          %v1663 = vrot.slane %v1658, %v1662
          %v1666 = vsel %vm692, %v1653, 0
          %1668 = vmatprep.subr.mxu0 0.0
          %1669 = vmatpush1.msra.mxu0 0.0
          %1670 = vmatprep.subr.mxu0 0.0
          %1671 = vmatpush1.msra.mxu0 0.0
          %1672 = vmatprep.subr.mxu0 0.0
          %1673 = vmatpush1.msra.mxu0 0.0
          %1674 = vmatprep.subr.mxu0 0.0
          %1675 = vmatpush1.msra.mxu0 0.0
          %1676 = vmatprep.subr.mxu0 0.0
          %1677 = vmatpush1.msra.mxu0 0.0
          %1678 = vmatprep.subr.mxu0 0.0
          %1679 = vmatpush1.msra.mxu0 0.0
          %1680 = vmatprep.subr.mxu0 0.0
          %1681 = vmatpush1.msra.mxu0 0.0
          %1682 = vmatprep.subr.mxu0 0.0
          %1683 = vmatpush1.msra.mxu0 0.0
          %1684 = vmatprep.subr.mxu0 0.0
          %1685 = vmatpush1.msra.mxu0 0.0
          %1686 = vmatprep.subr.mxu0 0.0
          %1687 = vmatpush1.msra.mxu0 0.0
          %1688 = vmatprep.subr.mxu0 0.0
          %1689 = vmatpush1.msra.mxu0 0.0
          %1690 = vmatprep.subr.mxu0 0.0
          %1691 = vmatpush1.msra.mxu0 0.0
          %1692 = vmatprep.subr.mxu0 0.0
          %1693 = vmatpush1.msra.mxu0 %v1657
          %1694 = vmatprep.subr.mxu0 0.0
          %1695 = vmatpush1.msra.mxu0 %v1656
          %1696 = vmatprep.subr.mxu0 0.0
          %1697 = vmatpush1.msra.mxu0 %v1655
          %1698 = vmatprep.subr.mxu0 0.0
          %1699 = vmatpush1.msra.mxu0 %v1654
          %1700 = vmatprep.subr.mxu0 0.0
          %1701 = vmatpush2.msra.mxu0 0.0
          %1702 = vmatprep.subr.mxu0 0.0
          %1703 = vmatpush2.msra.mxu0 0.0
          %1704 = vmatprep.subr.mxu0 0.0
          %1705 = vmatpush2.msra.mxu0 0.0
          %1706 = vmatprep.subr.mxu0 0.0
          %1707 = vmatpush2.msra.mxu0 0.0
          %1708 = vmatprep.subr.mxu0 0.0
          %1709 = vmatpush2.msra.mxu0 0.0
          %1710 = vmatprep.subr.mxu0 0.0
          %1711 = vmatpush2.msra.mxu0 0.0
          %1712 = vmatprep.subr.mxu0 0.0
          %1713 = vmatpush2.msra.mxu0 0.0
          %1714 = vmatprep.subr.mxu0 0.0
          %1715 = vmatpush2.msra.mxu0 0.0
          %1716 = vmatprep.subr.mxu0 0.0
          %1717 = vmatpush2.msra.mxu0 0.0
          %1718 = vmatprep.subr.mxu0 0.0
          %1719 = vmatpush2.msra.mxu0 0.0
          %1720 = vmatprep.subr.mxu0 0.0
          %1721 = vmatpush2.msra.mxu0 0.0
          %1722 = vmatprep.subr.mxu0 0.0
          %1723 = vmatpush2.msra.mxu0 0.0
          %1724 = vmatprep.subr.mxu0 0.0
          %1725 = vmatpush2.msra.mxu0 0.0
          %1726 = vmatprep.subr.mxu0 0.0
          %1727 = vmatpush2.msra.mxu0 0.0
          %1728 = vmatprep.subr.mxu0 0.0
          %1729 = vmatpush2.msra.mxu0 0.0
          %1730 = vmatprep.subr.mxu0 0.0
          %1731 = vmatpush2.msra.mxu0 0.0
          %1732 = vmatprep.mubr.f32.mxu0 0.0
          %1733 = vmatmul.mubr.f32.gmra.mxu0 %v1666
          %v1734 = vpop.f32.mrf.mxu0
          %v1735 = vadd.f32 %v1663, %v1734
          %v1736 = vpop.f32.mrf.mxu0
          %1737 = vdwg.mxu0
          %1738 = vst.msk [vmem:[%s560] sm:$0xff] %vm692, %v1735
        $region100: #{tpu_custom_call.1} parent=63 // pred_fallthru
          _
        %s1739 = sand.u32 %s314, 1
        %s1740 = scalar_lea.sflag [#allocation8], %s1739
        %s1741 = sand.u32 %s314, 1
        %s1742 = smul.addr %s1741, 8
        %s1743 = scalar_lea.vmem [#allocation18], %s1742
        // Predicated region
        $region101: #{tpu_custom_call.1} parent=63 // pred_check
          %p1744 = pneg %p324
        $region102: #{tpu_custom_call.1} parent=63 // pred_check_branch
          %1746 = sbr.rel (%p1744) target = $region104
        $region103: #{tpu_custom_call.1} parent=63 // pred_region
          %s1748 = ssub.s32 128, 128
          %1749 = vsyncadd %s1740, %s1748
          %s1750 = sadd.s32 %s39, %s38
          %s1751 = smul.addr %s1750, 128
          %s1752 = scalar_lea.hbm %s11, %s1751
          %s1754 = sshll.u32 %s1743, 4
          %s1755 = int_to_ptr.vmem [resolvable:$true] %s1754
          %1757 = dma.vmem_to_hbm [thread:$0]  %s1755, 128, %s1752, %s1740
        $region104: #{tpu_custom_call.1} parent=63 // pred_fallthru
          _
      $region64: #{tpu_custom_call.1} parent=5 // pred_fallthru
        _
      %p1758 = scmp.le.s32.totalorder 2, %s28
      // Predicated region
      $region105: #{tpu_custom_call.1} parent=5 // pred_check
        %p1759 = pneg %p1758
      $region106: #{tpu_custom_call.1} parent=5 // pred_check_branch
        %1761 = sbr.rel (%p1759) target = $region108
      $region107: #{tpu_custom_call.1} parent=5 // pred_region
        %s1762 = ssub.s32 %s28, 2
        // Predicated region
        $region109: #{tpu_custom_call.1} parent=107 // pred_check
          %p1763 = pneg %p330
        $region110: #{tpu_custom_call.1} parent=107 // pred_check_branch
          %1765 = sbr.rel (%p1763) target = $region112
        $region111: #{tpu_custom_call.1} parent=107 // pred_region
          %s1766 = sand.u32 %s315, 1
          %s1767 = scalar_lea.sflag [#allocation8], %s1766
          %s1768 = sand.u32 %s315, 1
          %s1769 = smul.addr %s1768, 8
          %s1770 = scalar_lea.vmem [#allocation18], %s1769
          %1771 = dma.done %s1767, 128
        $region112: #{tpu_custom_call.1} parent=107 // pred_fallthru
          _
      $region108: #{tpu_custom_call.1} parent=5 // pred_fallthru
        _
    $region6: #{tpu_custom_call.1} parent=1 // loop_footer
      %s32 = sadd.s32 1, %s28
    $region7: #{tpu_custom_call.1} parent=1 // loop_footer_branch
      %27 = sbr.rel target = $region3
    $region8: #{tpu_custom_call.1} parent=1 // loop_exit
      _
    %1772 = vsyncpa [#allocation7], 1
    %s1773 = scalar_lea.sflag [#allocation7], 1
    %1774 = vsyncpa %s1773, 1
    %1775 = vsyncpa [#allocation10], 1
    %s1776 = scalar_lea.sflag [#allocation10], 1
    %1777 = vsyncpa %s1776, 1
    %1778 = vsyncpa [#allocation13], 1
    %1779 = vsyncpa [#allocation16], 1
    %1780 = vsyncpa [#allocation8], 1
    %s1781 = scalar_lea.sflag [#allocation8], 1
    %1782 = vsyncpa %s1781, 1

</llo_original>
